<compile_context>
chip_gen: v5e
topology: v5e:2x2
jax: 0.10.0
libtpu: 0.0.40
codegen_flags: <defaults>
</compile_context>

<pallas_src>
import functools

import jax
import jax.numpy as jnp
from jax.experimental import pallas as pl
from jax.experimental.pallas import tpu as pltpu


# ------------------------------ fused kernel --------------------------------

def _fused_gat3_kernel(x_ref, madd_ref,
                       w1_ref, b1_ref, w2_ref, b2_ref, w3_ref, b3_ref,
                       o_ref, *, heads1, heads3, cp_hidden, cp_out):
    """Whole 3-layer GAT forward for one graph (all refs are VMEM blocks)."""
    madd = madd_ref[...]                       # (N, N) additive mask: 0 / -1e30
    N = madd.shape[0]

    def tile_rows(a, h):                       # stack mask along sublanes per head
        return a if h == 1 else jnp.concatenate([a] * h, axis=0)

    madd_in = tile_rows(madd, heads1)          # (heads1*N, N)
    madd_out = tile_rows(madd, heads3)         # (heads3*N, N)

    def gat_layer(x, w_ref, b_ref, heads, cp, madd_h, concat, elu):
        # x: (N, K).  W_ext columns = [per-head features | src/dst att cols | 0-pad].
        xb = x if x.dtype == jnp.bfloat16 else x.astype(jnp.bfloat16)
        h = jnp.dot(xb, w_ref[...], preferred_element_type=jnp.float32)   # (N, Wext)
        base = heads * cp
        # Stacked logits for ALL heads -> one softmax chain.
        blocks = []
        for hd in range(heads):                                           # static unroll
            a_src = h[:, base + 2 * hd:base + 2 * hd + 1]                 # (N, 1)
            a_dst = h[:, base + 2 * hd + 1:base + 2 * hd + 2]             # (N, 1)
            blocks.append(a_dst + jnp.transpose(a_src))                   # e[i,j]=dst_i+src_j
        e = blocks[0] if heads == 1 else jnp.concatenate(blocks, axis=0)  # (heads*N, N)
        e = jnp.maximum(e, 0.2 * e) + madd_h                              # LeakyReLU(0.2)+mask
        m = jnp.max(e, axis=-1, keepdims=True)
        p = jnp.exp(e - m)                       # masked entries underflow to exactly 0
        denom = jnp.sum(p, axis=-1, keepdims=True)     # >= 1 (self-loop is the row max)
        alpha = (p * pl.reciprocal(denom, approx=True)).astype(jnp.bfloat16)
        head_outs = []
        for hd in range(heads):
            hh = h[:, hd * cp:(hd + 1) * cp].astype(jnp.bfloat16)         # (N, cp)
            a_hd = alpha[hd * N:(hd + 1) * N, :]                          # (N, N)
            head_outs.append(jnp.dot(a_hd, hh,
                                     preferred_element_type=jnp.float32))  # (N, cp)
        if concat:
            out = head_outs[0] if heads == 1 else jnp.concatenate(head_outs, axis=-1)
        else:
            out = head_outs[0]
            for t in head_outs[1:]:
                out = out + t
            out = out * (1.0 / heads)                                     # mean over heads
        out = out + b_ref[...]
        if elu:
            out = jnp.where(out > 0, out, jnp.exp(out) - 1.0)             # ELU(alpha=1), f32
        return out

    x = gat_layer(x_ref[...], w1_ref, b1_ref, heads1, cp_hidden, madd_in, True, True)
    x = gat_layer(x, w2_ref, b2_ref, heads1, cp_hidden, madd_in, True, True)
    x = gat_layer(x, w3_ref, b3_ref, heads3, cp_out, madd_out, False, False)
    o_ref[...] = x


def inductive_gat_forward(x_b, madd_b, params, *, num_classes, heads_in, heads_out,
                          cp_hidden=256, cp_out=128):
    """x_b: (B, N, F_pad) bf16; madd_b: (B, N, N) f32 additive mask."""
    w1, b1 = params["conv1"]
    w2, b2 = params["conv2"]
    w3, b3 = params["conv3"]
    B, N, F = x_b.shape

    kernel = functools.partial(_fused_gat3_kernel, heads1=heads_in, heads3=heads_out,
                               cp_hidden=cp_hidden, cp_out=cp_out)

    def per_graph(shape):   # one graph per grid step (leading dim squeezed)
        return pl.BlockSpec((None,) + shape, lambda b: (b, 0, 0))

    def resident(shape):    # constant block index -> weights stay VMEM-resident
        return pl.BlockSpec(shape, lambda b, _n=len(shape): (0,) * _n)

    out_padded = pl.pallas_call(
        kernel,
        out_shape=jax.ShapeDtypeStruct((B, N, cp_out), jnp.float32),
        grid=(B,),
        in_specs=[per_graph((N, F)), per_graph((N, N)),
                  resident(w1.shape), resident(b1.shape),
                  resident(w2.shape), resident(b2.shape),
                  resident(w3.shape), resident(b3.shape)],
        out_specs=per_graph((N, cp_out)),
        compiler_params=pltpu.CompilerParams(
            dimension_semantics=("parallel",)),
    )(x_b, madd_b, w1, b1, w2, b2, w3, b3)
    return out_padded[..., :num_classes]    # drop padded class lanes once, at the end


# --------------------------- parameter init / pack ---------------------------

def _pad_rows(w, groups, r_real, r_pad):
    """(groups*r_real, M) -> (groups*r_pad, M); padded rows are zero."""
    m = w.shape[1]
    w = w.reshape(groups, r_real, m)
    out = jnp.zeros((groups, r_pad, m), w.dtype).at[:, :r_real, :].set(w)
    return out.reshape(groups * r_pad, m)


def _pad_cols(w, heads, c_real, c_pad):
    """(K, heads*c_real) -> (K, heads*c_pad); padded output lanes are zero."""
    k = w.shape[0]
    w = w.reshape(k, heads, c_real)
    out = jnp.zeros((k, heads, c_pad), w.dtype).at[:, :, :c_real].set(w)
    return out.reshape(k, heads * c_pad)


def _pad_vec(v, heads, c_real, c_pad):
    v = v.reshape(heads, c_real)
    return jnp.zeros((heads, c_pad), v.dtype).at[:, :c_real].set(v)


def _glorot(key, shape, fan_in, fan_out):
    limit = (6.0 / (fan_in + fan_out)) ** 0.5
    return jax.random.uniform(key, shape, jnp.float32, -limit, limit)


def _init_gat_conv_raw(key, in_channels, out_channels, heads, concat):
    """Unpadded params with the exact shapes of torch_geometric GATConv."""
    k_w, k_s, k_d = jax.random.split(key, 3)
    W = _glorot(k_w, (in_channels, heads * out_channels), in_channels, heads * out_channels)
    att_src = _glorot(k_s, (heads, out_channels), out_channels, 1)
    att_dst = _glorot(k_d, (heads, out_channels), out_channels, 1)
    bias_dim = heads * out_channels if concat else out_channels
    bias = jnp.zeros((bias_dim,), jnp.float32)
    return W, att_src, att_dst, bias


def _pack_gat_layer(W, att_src, att_dst, bias, *, in_groups, in_real, in_pad,
                    heads, out_real, out_pad, concat):
    """Pad W to lane-dense per-head blocks and fold the attention vectors into
    2*heads extra columns so a_src/a_dst are produced by the feature matmul."""
    Wp = _pad_rows(W, in_groups, in_real, in_pad)        # zero rows x zero input lanes
    Wp = _pad_cols(Wp, heads, out_real, out_pad)         # (K_pad, heads*out_pad)
    s_pad = _pad_vec(att_src, heads, out_real, out_pad)  # (heads, out_pad)
    d_pad = _pad_vec(att_dst, heads, out_real, out_pad)
    att_cols = []
    for hd in range(heads):
        w_hd = Wp[:, hd * out_pad:(hd + 1) * out_pad]    # (K_pad, out_pad)
        att_cols.append(w_hd @ s_pad[hd])                # src column for head hd
        att_cols.append(w_hd @ d_pad[hd])                # dst column for head hd
    att_cols = jnp.stack(att_cols, axis=1)               # (K_pad, 2*heads)
    core = jnp.concatenate([Wp, att_cols], axis=1)
    total = heads * out_pad + 2 * heads
    total_pad = ((total + 127) // 128) * 128              # 640 (L1/L2), 256 (L3)
    W_ext = jnp.zeros((core.shape[0], total_pad), jnp.float32).at[:, :total].set(core)
    bias_heads = heads if concat else 1
    b_pad = _pad_vec(bias, bias_heads, out_real, out_pad).reshape(1, bias_heads * out_pad)
    return W_ext.astype(jnp.bfloat16), b_pad


def init_params(key, num_features, num_classes, heads_in, heads_out,
                num_hidden=254, cp_hidden=256, cp_out=128, f_in_pad=128):
    k1, k2, k3 = jax.random.split(key, 3)
    raw1 = _init_gat_conv_raw(k1, num_features, num_hidden, heads_in, True)
    raw2 = _init_gat_conv_raw(k2, num_hidden * heads_in, num_hidden, heads_in, True)
    raw3 = _init_gat_conv_raw(k3, num_hidden * heads_in, num_classes, heads_out, False)
    conv1 = _pack_gat_layer(*raw1, in_groups=1, in_real=num_features, in_pad=f_in_pad,
                            heads=heads_in, out_real=num_hidden, out_pad=cp_hidden,
                            concat=True)
    conv2 = _pack_gat_layer(*raw2, in_groups=heads_in, in_real=num_hidden, in_pad=cp_hidden,
                            heads=heads_in, out_real=num_hidden, out_pad=cp_hidden,
                            concat=True)
    conv3 = _pack_gat_layer(*raw3, in_groups=heads_in, in_real=num_hidden, in_pad=cp_hidden,
                            heads=heads_out, out_real=num_classes, out_pad=cp_out,
                            concat=False)
    return {"conv1": conv1, "conv2": conv2, "conv3": conv3}


# ----------------------------------- main -----------------------------------

if __name__ == "__main__":
    num_features = 8
    num_classes = 6
    num_input_att_heads = 2
    num_output_att_heads = 1
    N = 16          # number of graph nodes
    num_edges = 40
    F_PAD = 128     # lane-padded input feature width

    key = jax.random.PRNGKey(0)
    k_x, k_src, k_dst, k_params = jax.random.split(key, 4)

    x = jax.random.normal(k_x, (N, num_features), jnp.float32)

    # random directed edges (no explicit self-edges; GATConv adds self-loops)
    src = jax.random.randint(k_src, (num_edges,), 0, N)
    dst = jax.random.randint(k_dst, (num_edges,), 0, N)
    keep = src != dst

    # dense adjacency mask: adj[i, j] = 1 iff edge j -> i, plus self-loops
    # TODO(synk): duplicate (src,dst) edges collapse here; PyG's edge softmax
    # would count each duplicate edge as a separate term.
    adj = jnp.zeros((N, N), jnp.float32)
    adj = adj.at[dst, src].set(jnp.where(keep, 1.0, 0.0))
    adj = adj.at[jnp.arange(N), jnp.arange(N)].set(1.0)

    # Host-side prep: lane-pad + bf16-cast features; build the additive softmax mask.
    x_pad = jnp.zeros((N, F_PAD), jnp.float32).at[:, :num_features].set(x)
    x_b = x_pad.astype(jnp.bfloat16)[None]                            # (1, N, 128)
    madd_b = jnp.where(adj > 0.0, 0.0, -1e30).astype(jnp.float32)[None]  # (1, N, N)

    params = init_params(k_params, num_features, num_classes,
                         num_input_att_heads, num_output_att_heads, f_in_pad=F_PAD)

    fwd = jax.jit(functools.partial(inductive_gat_forward,
                                    num_classes=num_classes,
                                    heads_in=num_input_att_heads,
                                    heads_out=num_output_att_heads))
    out = jax.block_until_ready(fwd(x_b, madd_b, params))[0]
    assert out.shape == (N, num_classes), out.shape
    assert bool(jnp.all(jnp.isfinite(out)))
    print("KERNEL_OK")
</pallas_src>

<mosaic_0001>
module attributes {stable_mosaic.version = 11 : i64} {
  func.func @_fused_gat3_kernel(%arg0: i32, %arg1: memref<1x16x128xbf16, #tpu.memory_space<vmem>>, %arg2: memref<1x16x16xf32, #tpu.memory_space<vmem>>, %arg3: memref<128x640xbf16, #tpu.memory_space<vmem>>, %arg4: memref<1x512xf32, #tpu.memory_space<vmem>>, %arg5: memref<512x640xbf16, #tpu.memory_space<vmem>>, %arg6: memref<1x512xf32, #tpu.memory_space<vmem>>, %arg7: memref<512x256xbf16, #tpu.memory_space<vmem>>, %arg8: memref<1x128xf32, #tpu.memory_space<vmem>>, %arg9: memref<1x16x128xf32, #tpu.memory_space<vmem>>) attributes {dimension_semantics = [#tpu.dimension_semantics<parallel>], iteration_bounds = array<i64: 1>, scalar_prefetch = 0 : i64, scratch_operands = 0 : i64, tpu.core_type = #tpu.core_type<tc>, window_params = [{transform_indices = @transform_0, window_bounds = array<i64: 1, 16, 128>}, {transform_indices = @transform_1, window_bounds = array<i64: 1, 16, 16>}, {pipeline_mode = #tpu.pipeline_mode<synchronous>, transform_indices = @transform_2, window_bounds = array<i64: 128, 640>}, {pipeline_mode = #tpu.pipeline_mode<synchronous>, transform_indices = @transform_3, window_bounds = array<i64: 1, 512>}, {pipeline_mode = #tpu.pipeline_mode<synchronous>, transform_indices = @transform_4, window_bounds = array<i64: 512, 640>}, {pipeline_mode = #tpu.pipeline_mode<synchronous>, transform_indices = @transform_5, window_bounds = array<i64: 1, 512>}, {pipeline_mode = #tpu.pipeline_mode<synchronous>, transform_indices = @transform_6, window_bounds = array<i64: 512, 256>}, {pipeline_mode = #tpu.pipeline_mode<synchronous>, transform_indices = @transform_7, window_bounds = array<i64: 1, 128>}, {transform_indices = @transform_8, window_bounds = array<i64: 1, 16, 128>}]} {
    %c0 = arith.constant 0 : index
    %c0_0 = arith.constant 0 : index
    %c0_1 = arith.constant 0 : index
    %0 = vector.load %arg2[%c0, %c0_0, %c0_1] : memref<1x16x16xf32, #tpu.memory_space<vmem>>, vector<1x16x16xf32>
    %1 = vector.shape_cast %0 : vector<1x16x16xf32> to vector<16x16xf32>
    %2 = tpu.concatenate %1, %1 in 0 : vector<16x16xf32>, vector<16x16xf32> -> vector<32x16xf32>
    %c0_2 = arith.constant 0 : index
    %c0_3 = arith.constant 0 : index
    %c0_4 = arith.constant 0 : index
    %3 = vector.load %arg1[%c0_2, %c0_3, %c0_4] : memref<1x16x128xbf16, #tpu.memory_space<vmem>>, vector<1x16x128xbf16>
    %4 = vector.shape_cast %3 : vector<1x16x128xbf16> to vector<16x128xbf16>
    %c0_5 = arith.constant 0 : index
    %c0_6 = arith.constant 0 : index
    %5 = vector.load %arg3[%c0_5, %c0_6] : memref<128x640xbf16, #tpu.memory_space<vmem>>, vector<128x640xbf16>
    %cst = arith.constant dense<0.000000e+00> : vector<16x640xf32>
    %6 = tpu.matmul %4, %5, %cst {dimension_numbers = #tpu.dot_dimension_numbers<[1], [0], [0], [1], [0, 0, 1, 1], [], []>} : vector<16x128xbf16>, vector<128x640xbf16>, vector<16x640xf32> -> vector<16x640xf32>
    %7 = vector.extract_strided_slice %6 {offsets = [0, 512], sizes = [16, 1], strides = [1, 1]} : vector<16x640xf32> to vector<16x1xf32>
    %8 = vector.extract_strided_slice %6 {offsets = [0, 513], sizes = [16, 1], strides = [1, 1]} : vector<16x640xf32> to vector<16x1xf32>
    %9 = tpu.transpose %7, [1, 0] : vector<16x1xf32> -> vector<1x16xf32>
    %10 = vector.broadcast %8 : vector<16x1xf32> to vector<16x16xf32>
    %11 = vector.broadcast %9 : vector<1x16xf32> to vector<16x16xf32>
    %12 = arith.addf %10, %11 : vector<16x16xf32>
    %13 = vector.extract_strided_slice %6 {offsets = [0, 514], sizes = [16, 1], strides = [1, 1]} : vector<16x640xf32> to vector<16x1xf32>
    %14 = vector.extract_strided_slice %6 {offsets = [0, 515], sizes = [16, 1], strides = [1, 1]} : vector<16x640xf32> to vector<16x1xf32>
    %15 = tpu.transpose %13, [1, 0] : vector<16x1xf32> -> vector<1x16xf32>
    %16 = vector.broadcast %14 : vector<16x1xf32> to vector<16x16xf32>
    %17 = vector.broadcast %15 : vector<1x16xf32> to vector<16x16xf32>
    %18 = arith.addf %16, %17 : vector<16x16xf32>
    %19 = tpu.concatenate %12, %18 in 0 : vector<16x16xf32>, vector<16x16xf32> -> vector<32x16xf32>
    %cst_7 = arith.constant 2.000000e-01 : f32
    %20 = vector.broadcast %cst_7 : f32 to vector<32x16xf32>
    %21 = arith.mulf %20, %19 : vector<32x16xf32>
    %22 = arith.maximumf %19, %21 : vector<32x16xf32>
    %23 = arith.addf %22, %2 : vector<32x16xf32>
    %cst_8 = arith.constant dense<0xFF800000> : vector<32xf32>
    %24 = vector.multi_reduction <maximumf>, %23, %cst_8 [1] : vector<32x16xf32> to vector<32xf32>
    %25 = vector.shape_cast %24 : vector<32xf32> to vector<32x1xf32>
    %26 = vector.broadcast %25 : vector<32x1xf32> to vector<32x16xf32>
    %27 = arith.subf %23, %26 : vector<32x16xf32>
    %28 = math.exp %27 : vector<32x16xf32>
    %cst_9 = arith.constant dense<0.000000e+00> : vector<32xf32>
    %29 = vector.multi_reduction <add>, %28, %cst_9 [1] : vector<32x16xf32> to vector<32xf32>
    %30 = vector.shape_cast %29 : vector<32xf32> to vector<32x1xf32>
    %31 = tpu.reciprocal %30 {approx = true} : vector<32x1xf32> -> vector<32x1xf32>
    %32 = vector.broadcast %31 : vector<32x1xf32> to vector<32x16xf32>
    %33 = arith.mulf %28, %32 : vector<32x16xf32>
    %34 = arith.truncf %33 : vector<32x16xf32> to vector<32x16xbf16>
    %35 = vector.extract_strided_slice %6 {offsets = [0, 0], sizes = [16, 256], strides = [1, 1]} : vector<16x640xf32> to vector<16x256xf32>
    %36 = arith.truncf %35 : vector<16x256xf32> to vector<16x256xbf16>
    %37 = vector.extract_strided_slice %34 {offsets = [0, 0], sizes = [16, 16], strides = [1, 1]} : vector<32x16xbf16> to vector<16x16xbf16>
    %cst_10 = arith.constant dense<0.000000e+00> : vector<16x256xf32>
    %38 = tpu.matmul %37, %36, %cst_10 {dimension_numbers = #tpu.dot_dimension_numbers<[1], [0], [0], [1], [0, 0, 1, 1], [], []>} : vector<16x16xbf16>, vector<16x256xbf16>, vector<16x256xf32> -> vector<16x256xf32>
    %39 = vector.extract_strided_slice %6 {offsets = [0, 256], sizes = [16, 256], strides = [1, 1]} : vector<16x640xf32> to vector<16x256xf32>
    %40 = arith.truncf %39 : vector<16x256xf32> to vector<16x256xbf16>
    %41 = vector.extract_strided_slice %34 {offsets = [16, 0], sizes = [16, 16], strides = [1, 1]} : vector<32x16xbf16> to vector<16x16xbf16>
    %cst_11 = arith.constant dense<0.000000e+00> : vector<16x256xf32>
    %42 = tpu.matmul %41, %40, %cst_11 {dimension_numbers = #tpu.dot_dimension_numbers<[1], [0], [0], [1], [0, 0, 1, 1], [], []>} : vector<16x16xbf16>, vector<16x256xbf16>, vector<16x256xf32> -> vector<16x256xf32>
    %43 = tpu.concatenate %38, %42 in 1 : vector<16x256xf32>, vector<16x256xf32> -> vector<16x512xf32>
    %c0_12 = arith.constant 0 : index
    %c0_13 = arith.constant 0 : index
    %44 = vector.load %arg4[%c0_12, %c0_13] : memref<1x512xf32, #tpu.memory_space<vmem>>, vector<1x512xf32>
    %45 = vector.broadcast %44 : vector<1x512xf32> to vector<16x512xf32>
    %46 = arith.addf %43, %45 : vector<16x512xf32>
    %cst_14 = arith.constant 0.000000e+00 : f32
    %47 = vector.broadcast %cst_14 : f32 to vector<16x512xf32>
    %48 = arith.cmpf ogt, %46, %47 : vector<16x512xf32>
    %49 = math.exp %46 : vector<16x512xf32>
    %cst_15 = arith.constant 1.000000e+00 : f32
    %50 = vector.broadcast %cst_15 : f32 to vector<16x512xf32>
    %51 = arith.subf %49, %50 : vector<16x512xf32>
    %52 = arith.select %48, %46, %51 : vector<16x512xi1>, vector<16x512xf32>
    %53 = arith.truncf %52 : vector<16x512xf32> to vector<16x512xbf16>
    %c0_16 = arith.constant 0 : index
    %c0_17 = arith.constant 0 : index
    %54 = vector.load %arg5[%c0_16, %c0_17] : memref<512x640xbf16, #tpu.memory_space<vmem>>, vector<512x640xbf16>
    %cst_18 = arith.constant dense<0.000000e+00> : vector<16x640xf32>
    %55 = tpu.matmul %53, %54, %cst_18 {dimension_numbers = #tpu.dot_dimension_numbers<[1], [0], [0], [1], [0, 0, 1, 1], [], []>} : vector<16x512xbf16>, vector<512x640xbf16>, vector<16x640xf32> -> vector<16x640xf32>
    %56 = vector.extract_strided_slice %55 {offsets = [0, 512], sizes = [16, 1], strides = [1, 1]} : vector<16x640xf32> to vector<16x1xf32>
    %57 = vector.extract_strided_slice %55 {offsets = [0, 513], sizes = [16, 1], strides = [1, 1]} : vector<16x640xf32> to vector<16x1xf32>
    %58 = tpu.transpose %56, [1, 0] : vector<16x1xf32> -> vector<1x16xf32>
    %59 = vector.broadcast %57 : vector<16x1xf32> to vector<16x16xf32>
    %60 = vector.broadcast %58 : vector<1x16xf32> to vector<16x16xf32>
    %61 = arith.addf %59, %60 : vector<16x16xf32>
    %62 = vector.extract_strided_slice %55 {offsets = [0, 514], sizes = [16, 1], strides = [1, 1]} : vector<16x640xf32> to vector<16x1xf32>
    %63 = vector.extract_strided_slice %55 {offsets = [0, 515], sizes = [16, 1], strides = [1, 1]} : vector<16x640xf32> to vector<16x1xf32>
    %64 = tpu.transpose %62, [1, 0] : vector<16x1xf32> -> vector<1x16xf32>
    %65 = vector.broadcast %63 : vector<16x1xf32> to vector<16x16xf32>
    %66 = vector.broadcast %64 : vector<1x16xf32> to vector<16x16xf32>
    %67 = arith.addf %65, %66 : vector<16x16xf32>
    %68 = tpu.concatenate %61, %67 in 0 : vector<16x16xf32>, vector<16x16xf32> -> vector<32x16xf32>
    %cst_19 = arith.constant 2.000000e-01 : f32
    %69 = vector.broadcast %cst_19 : f32 to vector<32x16xf32>
    %70 = arith.mulf %69, %68 : vector<32x16xf32>
    %71 = arith.maximumf %68, %70 : vector<32x16xf32>
    %72 = arith.addf %71, %2 : vector<32x16xf32>
    %cst_20 = arith.constant dense<0xFF800000> : vector<32xf32>
    %73 = vector.multi_reduction <maximumf>, %72, %cst_20 [1] : vector<32x16xf32> to vector<32xf32>
    %74 = vector.shape_cast %73 : vector<32xf32> to vector<32x1xf32>
    %75 = vector.broadcast %74 : vector<32x1xf32> to vector<32x16xf32>
    %76 = arith.subf %72, %75 : vector<32x16xf32>
    %77 = math.exp %76 : vector<32x16xf32>
    %cst_21 = arith.constant dense<0.000000e+00> : vector<32xf32>
    %78 = vector.multi_reduction <add>, %77, %cst_21 [1] : vector<32x16xf32> to vector<32xf32>
    %79 = vector.shape_cast %78 : vector<32xf32> to vector<32x1xf32>
    %80 = tpu.reciprocal %79 {approx = true} : vector<32x1xf32> -> vector<32x1xf32>
    %81 = vector.broadcast %80 : vector<32x1xf32> to vector<32x16xf32>
    %82 = arith.mulf %77, %81 : vector<32x16xf32>
    %83 = arith.truncf %82 : vector<32x16xf32> to vector<32x16xbf16>
    %84 = vector.extract_strided_slice %55 {offsets = [0, 0], sizes = [16, 256], strides = [1, 1]} : vector<16x640xf32> to vector<16x256xf32>
    %85 = arith.truncf %84 : vector<16x256xf32> to vector<16x256xbf16>
    %86 = vector.extract_strided_slice %83 {offsets = [0, 0], sizes = [16, 16], strides = [1, 1]} : vector<32x16xbf16> to vector<16x16xbf16>
    %cst_22 = arith.constant dense<0.000000e+00> : vector<16x256xf32>
    %87 = tpu.matmul %86, %85, %cst_22 {dimension_numbers = #tpu.dot_dimension_numbers<[1], [0], [0], [1], [0, 0, 1, 1], [], []>} : vector<16x16xbf16>, vector<16x256xbf16>, vector<16x256xf32> -> vector<16x256xf32>
    %88 = vector.extract_strided_slice %55 {offsets = [0, 256], sizes = [16, 256], strides = [1, 1]} : vector<16x640xf32> to vector<16x256xf32>
    %89 = arith.truncf %88 : vector<16x256xf32> to vector<16x256xbf16>
    %90 = vector.extract_strided_slice %83 {offsets = [16, 0], sizes = [16, 16], strides = [1, 1]} : vector<32x16xbf16> to vector<16x16xbf16>
    %cst_23 = arith.constant dense<0.000000e+00> : vector<16x256xf32>
    %91 = tpu.matmul %90, %89, %cst_23 {dimension_numbers = #tpu.dot_dimension_numbers<[1], [0], [0], [1], [0, 0, 1, 1], [], []>} : vector<16x16xbf16>, vector<16x256xbf16>, vector<16x256xf32> -> vector<16x256xf32>
    %92 = tpu.concatenate %87, %91 in 1 : vector<16x256xf32>, vector<16x256xf32> -> vector<16x512xf32>
    %c0_24 = arith.constant 0 : index
    %c0_25 = arith.constant 0 : index
    %93 = vector.load %arg6[%c0_24, %c0_25] : memref<1x512xf32, #tpu.memory_space<vmem>>, vector<1x512xf32>
    %94 = vector.broadcast %93 : vector<1x512xf32> to vector<16x512xf32>
    %95 = arith.addf %92, %94 : vector<16x512xf32>
    %cst_26 = arith.constant 0.000000e+00 : f32
    %96 = vector.broadcast %cst_26 : f32 to vector<16x512xf32>
    %97 = arith.cmpf ogt, %95, %96 : vector<16x512xf32>
    %98 = math.exp %95 : vector<16x512xf32>
    %cst_27 = arith.constant 1.000000e+00 : f32
    %99 = vector.broadcast %cst_27 : f32 to vector<16x512xf32>
    %100 = arith.subf %98, %99 : vector<16x512xf32>
    %101 = arith.select %97, %95, %100 : vector<16x512xi1>, vector<16x512xf32>
    %102 = arith.truncf %101 : vector<16x512xf32> to vector<16x512xbf16>
    %c0_28 = arith.constant 0 : index
    %c0_29 = arith.constant 0 : index
    %103 = vector.load %arg7[%c0_28, %c0_29] : memref<512x256xbf16, #tpu.memory_space<vmem>>, vector<512x256xbf16>
    %cst_30 = arith.constant dense<0.000000e+00> : vector<16x256xf32>
    %104 = tpu.matmul %102, %103, %cst_30 {dimension_numbers = #tpu.dot_dimension_numbers<[1], [0], [0], [1], [0, 0, 1, 1], [], []>} : vector<16x512xbf16>, vector<512x256xbf16>, vector<16x256xf32> -> vector<16x256xf32>
    %105 = vector.extract_strided_slice %104 {offsets = [0, 128], sizes = [16, 1], strides = [1, 1]} : vector<16x256xf32> to vector<16x1xf32>
    %106 = vector.extract_strided_slice %104 {offsets = [0, 129], sizes = [16, 1], strides = [1, 1]} : vector<16x256xf32> to vector<16x1xf32>
    %107 = tpu.transpose %105, [1, 0] : vector<16x1xf32> -> vector<1x16xf32>
    %108 = vector.broadcast %106 : vector<16x1xf32> to vector<16x16xf32>
    %109 = vector.broadcast %107 : vector<1x16xf32> to vector<16x16xf32>
    %110 = arith.addf %108, %109 : vector<16x16xf32>
    %cst_31 = arith.constant 2.000000e-01 : f32
    %111 = vector.broadcast %cst_31 : f32 to vector<16x16xf32>
    %112 = arith.mulf %111, %110 : vector<16x16xf32>
    %113 = arith.maximumf %110, %112 : vector<16x16xf32>
    %114 = arith.addf %113, %1 : vector<16x16xf32>
    %cst_32 = arith.constant dense<0xFF800000> : vector<16xf32>
    %115 = vector.multi_reduction <maximumf>, %114, %cst_32 [1] : vector<16x16xf32> to vector<16xf32>
    %116 = vector.shape_cast %115 : vector<16xf32> to vector<16x1xf32>
    %117 = vector.broadcast %116 : vector<16x1xf32> to vector<16x16xf32>
    %118 = arith.subf %114, %117 : vector<16x16xf32>
    %119 = math.exp %118 : vector<16x16xf32>
    %cst_33 = arith.constant dense<0.000000e+00> : vector<16xf32>
    %120 = vector.multi_reduction <add>, %119, %cst_33 [1] : vector<16x16xf32> to vector<16xf32>
    %121 = vector.shape_cast %120 : vector<16xf32> to vector<16x1xf32>
    %122 = tpu.reciprocal %121 {approx = true} : vector<16x1xf32> -> vector<16x1xf32>
    %123 = vector.broadcast %122 : vector<16x1xf32> to vector<16x16xf32>
    %124 = arith.mulf %119, %123 : vector<16x16xf32>
    %125 = arith.truncf %124 : vector<16x16xf32> to vector<16x16xbf16>
    %126 = vector.extract_strided_slice %104 {offsets = [0, 0], sizes = [16, 128], strides = [1, 1]} : vector<16x256xf32> to vector<16x128xf32>
    %127 = arith.truncf %126 : vector<16x128xf32> to vector<16x128xbf16>
    %cst_34 = arith.constant dense<0.000000e+00> : vector<16x128xf32>
    %128 = tpu.matmul %125, %127, %cst_34 {dimension_numbers = #tpu.dot_dimension_numbers<[1], [0], [0], [1], [0, 0, 1, 1], [], []>} : vector<16x16xbf16>, vector<16x128xbf16>, vector<16x128xf32> -> vector<16x128xf32>
    %cst_35 = arith.constant 1.000000e+00 : f32
    %129 = vector.broadcast %cst_35 : f32 to vector<16x128xf32>
    %130 = arith.mulf %128, %129 : vector<16x128xf32>
    %c0_36 = arith.constant 0 : index
    %c0_37 = arith.constant 0 : index
    %131 = vector.load %arg8[%c0_36, %c0_37] : memref<1x128xf32, #tpu.memory_space<vmem>>, vector<1x128xf32>
    %132 = vector.broadcast %131 : vector<1x128xf32> to vector<16x128xf32>
    %133 = arith.addf %130, %132 : vector<16x128xf32>
    %c0_38 = arith.constant 0 : index
    %c0_39 = arith.constant 0 : index
    %c0_40 = arith.constant 0 : index
    %134 = vector.load %arg9[%c0_38, %c0_39, %c0_40] : memref<1x16x128xf32, #tpu.memory_space<vmem>>, vector<1x16x128xf32>
    %135 = vector.shape_cast %134 : vector<1x16x128xf32> to vector<16x128xf32>
    %136 = vector.shape_cast %133 : vector<16x128xf32> to vector<1x16x128xf32>
    tpu.vector_store %arg9[%c0_38, %c0_39, %c0_40], %136 {strides = array<i32>} : memref<1x16x128xf32, #tpu.memory_space<vmem>>, vector<1x16x128xf32>,
    return
  }
  func.func @transform_0(%arg0: i32) -> (i32, i32, i32) {
    %c0_i32 = arith.constant 0 : i32
    %c0_i32_0 = arith.constant 0 : i32
    %c0_i32_1 = arith.constant 0 : i32
    return %arg0, %c0_i32, %c0_i32_0 : i32, i32, i32
  }
  func.func @transform_1(%arg0: i32) -> (i32, i32, i32) {
    %c0_i32 = arith.constant 0 : i32
    %c0_i32_0 = arith.constant 0 : i32
    %c0_i32_1 = arith.constant 0 : i32
    return %arg0, %c0_i32, %c0_i32_0 : i32, i32, i32
  }
  func.func @transform_2(%arg0: i32) -> (i32, i32) {
    %c0_i32 = arith.constant 0 : i32
    %c0_i32_0 = arith.constant 0 : i32
    %c0_i32_1 = arith.constant 0 : i32
    return %c0_i32, %c0_i32_0 : i32, i32
  }
  func.func @transform_3(%arg0: i32) -> (i32, i32) {
    %c0_i32 = arith.constant 0 : i32
    %c0_i32_0 = arith.constant 0 : i32
    %c0_i32_1 = arith.constant 0 : i32
    return %c0_i32, %c0_i32_0 : i32, i32
  }
  func.func @transform_4(%arg0: i32) -> (i32, i32) {
    %c0_i32 = arith.constant 0 : i32
    %c0_i32_0 = arith.constant 0 : i32
    %c0_i32_1 = arith.constant 0 : i32
    return %c0_i32, %c0_i32_0 : i32, i32
  }
  func.func @transform_5(%arg0: i32) -> (i32, i32) {
    %c0_i32 = arith.constant 0 : i32
    %c0_i32_0 = arith.constant 0 : i32
    %c0_i32_1 = arith.constant 0 : i32
    return %c0_i32, %c0_i32_0 : i32, i32
  }
  func.func @transform_6(%arg0: i32) -> (i32, i32) {
    %c0_i32 = arith.constant 0 : i32
    %c0_i32_0 = arith.constant 0 : i32
    %c0_i32_1 = arith.constant 0 : i32
    return %c0_i32, %c0_i32_0 : i32, i32
  }
  func.func @transform_7(%arg0: i32) -> (i32, i32) {
    %c0_i32 = arith.constant 0 : i32
    %c0_i32_0 = arith.constant 0 : i32
    %c0_i32_1 = arith.constant 0 : i32
    return %c0_i32, %c0_i32_0 : i32, i32
  }
  func.func @transform_8(%arg0: i32) -> (i32, i32, i32) {
    %c0_i32 = arith.constant 0 : i32
    %c0_i32_0 = arith.constant 0 : i32
    %c0_i32_1 = arith.constant 0 : i32
    return %arg0, %c0_i32, %c0_i32_0 : i32, i32, i32
  }
}

</mosaic_0001>

<llo_original>
// kernel: inductive_gat_forward.1
$region0: #{inductive_gat_forward.1}
  #allocation0 [shape = 'u32[]', space=smem, size = 0x4, offset = 0x4, fixed_abs, tag = 'smem constant byte address 0x4 - core index']
  #allocation1 [shape = 'u32[72,128]{1,0:T(1,128)}', space=vmem, size = 0x9000, scoped, tag = 'internal scratch']
  %s0 = inlined_call_operand.hbm [shape: bf16[1,16,128], index: 0, kind: input, shape index: {}]
  %s1 = inlined_call_operand.hbm [shape: f32[1,16,16], index: 1, kind: input, shape index: {}]
  %s2 = inlined_call_operand.hbm [shape: bf16[128,640], index: 2, kind: input, shape index: {}]
  %s3 = inlined_call_operand.hbm [shape: f32[1,512], index: 3, kind: input, shape index: {}]
  %s4 = inlined_call_operand.hbm [shape: bf16[512,640], index: 4, kind: input, shape index: {}]
  %s5 = inlined_call_operand.vmem [shape: f32[1,512], index: 5, kind: input, shape index: {}]
  %s6 = inlined_call_operand.hbm [shape: bf16[512,256], index: 6, kind: input, shape index: {}]
  %s7 = inlined_call_operand.vmem [shape: f32[1,128], index: 7, kind: input, shape index: {}]
  %s8 = inlined_call_operand.vmem [shape: f32[1,16,128], index: 8, kind: output, shape index: {}]
  %s9 = sld [smem:[#allocation0]]
  $region66: #{inductive_gat_forward.1} parent=0
    _
  %s11 = ssub.s32 1, %s9
  %s12 = scalar_select 0, %s11, %s9
  $region1: #{inductive_gat_forward.1} parent=0
    #allocation2 [shape = 'u8[4096]{0}', space=vmem, size = 0x1000, scoped, tag = 'input window, operand 0, single buffered']
    #allocation3 [shape = 's32[1]{0}', space=sflag, size = 0x4, scoped, tag = 'scoped memory for inductive_gat_forward.1']
    #allocation4 [shape = 'u8[8192]{0}', space=vmem, size = 0x2000, scoped, tag = 'input window, operand 1, single buffered']
    #allocation5 [shape = 's32[1]{0}', space=sflag, size = 0x4, scoped, tag = 'scoped memory for inductive_gat_forward.1']
    #allocation6 [shape = 'u8[163840]{0}', space=vmem, size = 0x28000, scoped, tag = 'input window, operand 2, single buffered']
    #allocation7 [shape = 'u8[2048]{0}', space=vmem, size = 0x800, scoped, tag = 'input window, operand 3, single buffered']
    #allocation8 [shape = 's32[1]{0}', space=sflag, size = 0x4, scoped, tag = 'scoped memory for inductive_gat_forward.1']
    #allocation9 [shape = 'u8[655360]{0}', space=vmem, size = 0xa0000, scoped, tag = 'input window, operand 4, single buffered']
    #allocation10 [shape = 'u8[262144]{0}', space=vmem, size = 0x40000, scoped, tag = 'input window, operand 6, single buffered']
    #allocation11 [shape = 's32[1]{0}', space=sflag, size = 0x4, scoped, tag = 'scoped memory for inductive_gat_forward.1']
    %13 = vsyncpa [#allocation3], 0
    %14 = vsyncpa [#allocation5], 0
    %15 = vsyncpa [#allocation8], 0
    %16 = vsyncpa [#allocation11], 0
    // Predicated region
    $region2: #{inductive_gat_forward.1} parent=1 // pred_check
      _
    $region3: #{inductive_gat_forward.1} parent=1 // pred_check_branch
      %18 = sbr.rel (0) target = $region5
    $region4: #{inductive_gat_forward.1} parent=1 // pred_region
      %20 = vsyncadd [#allocation3], 0
      %s21 = sshll.u32 %s0, 4
      %s22 = int_to_ptr.hbm [resolvable:$true] %s21
      %s23 = sshll.u32 [#allocation2], 4
      %s24 = int_to_ptr.vmem [resolvable:$true] %s23
      %29 = dma.hbm_to_vmem [thread:$0]  %s22, 128, %s24, [#allocation3], 64, 64, 4
    $region5: #{inductive_gat_forward.1} parent=1 // pred_fallthru
      _
    // Predicated region
    $region6: #{inductive_gat_forward.1} parent=1 // pred_check
      _
    $region7: #{inductive_gat_forward.1} parent=1 // pred_check_branch
      %31 = sbr.rel (0) target = $region9
    $region8: #{inductive_gat_forward.1} parent=1 // pred_region
      %33 = vsyncadd [#allocation5], 0
      %s34 = sshll.u32 %s1, 4
      %s35 = int_to_ptr.hbm [resolvable:$true] %s34
      %s36 = sshll.u32 [#allocation4], 4
      %s37 = int_to_ptr.vmem [resolvable:$true] %s36
      %42 = dma.hbm_to_vmem [thread:$0]  %s35, 256, %s37, [#allocation5], 128, 128, 8
    $region9: #{inductive_gat_forward.1} parent=1 // pred_fallthru
      _
    // Predicated region
    $region10: #{inductive_gat_forward.1} parent=1 // pred_check
      _
    $region11: #{inductive_gat_forward.1} parent=1 // pred_check_branch
      %44 = sbr.rel (0) target = $region13
    $region12: #{inductive_gat_forward.1} parent=1 // pred_region
      %46 = vsyncadd [#allocation5], 0
      %s47 = sshll.u32 %s2, 4
      %s48 = int_to_ptr.hbm [resolvable:$true] %s47
      %s49 = sshll.u32 [#allocation6], 4
      %s50 = int_to_ptr.vmem [resolvable:$true] %s49
      %55 = dma.hbm_to_vmem [thread:$0]  %s48, 5120, %s50, [#allocation5], 320, 320, 20
    $region13: #{inductive_gat_forward.1} parent=1 // pred_fallthru
      _
    // Predicated region
    $region14: #{inductive_gat_forward.1} parent=1 // pred_check
      _
    $region15: #{inductive_gat_forward.1} parent=1 // pred_check_branch
      %57 = sbr.rel (0) target = $region17
    $region16: #{inductive_gat_forward.1} parent=1 // pred_region
      %59 = vsyncadd [#allocation8], 0
      %s61 = sshll.u32 %s3, 4
      %s62 = int_to_ptr.hbm [resolvable:$true] %s61
      %s63 = sshll.u32 [#allocation7], 4
      %s64 = int_to_ptr.vmem [resolvable:$true] %s63
      %66 = dma.hbm_to_vmem [thread:$0]  %s62, 64, %s64, [#allocation8]
    $region17: #{inductive_gat_forward.1} parent=1 // pred_fallthru
      _
    // Predicated region
    $region18: #{inductive_gat_forward.1} parent=1 // pred_check
      _
    $region19: #{inductive_gat_forward.1} parent=1 // pred_check_branch
      %68 = sbr.rel (0) target = $region21
    $region20: #{inductive_gat_forward.1} parent=1 // pred_region
      %70 = vsyncadd [#allocation8], 0
      %s71 = sshll.u32 %s4, 4
      %s72 = int_to_ptr.hbm [resolvable:$true] %s71
      %s73 = sshll.u32 [#allocation9], 4
      %s74 = int_to_ptr.vmem [resolvable:$true] %s73
      %79 = dma.hbm_to_vmem [thread:$0]  %s72, 20480, %s74, [#allocation8], 320, 320, 20
    $region21: #{inductive_gat_forward.1} parent=1 // pred_fallthru
      _
    // Predicated region
    $region22: #{inductive_gat_forward.1} parent=1 // pred_check
      _
    $region23: #{inductive_gat_forward.1} parent=1 // pred_check_branch
      %81 = sbr.rel (0) target = $region25
    $region24: #{inductive_gat_forward.1} parent=1 // pred_region
      _
    $region25: #{inductive_gat_forward.1} parent=1 // pred_fallthru
      _
    // Predicated region
    $region26: #{inductive_gat_forward.1} parent=1 // pred_check
      _
    $region27: #{inductive_gat_forward.1} parent=1 // pred_check_branch
      %83 = sbr.rel (0) target = $region29
    $region28: #{inductive_gat_forward.1} parent=1 // pred_region
      %85 = vsyncadd [#allocation11], 0
      %s86 = sshll.u32 %s6, 4
      %s87 = int_to_ptr.hbm [resolvable:$true] %s86
      %s88 = sshll.u32 [#allocation10], 4
      %s89 = int_to_ptr.vmem [resolvable:$true] %s88
      %94 = dma.hbm_to_vmem [thread:$0]  %s87, 8192, %s89, [#allocation11], 128, 128, 8
    $region29: #{inductive_gat_forward.1} parent=1 // pred_fallthru
      _
    // Predicated region
    $region30: #{inductive_gat_forward.1} parent=1 // pred_check
      _
    $region31: #{inductive_gat_forward.1} parent=1 // pred_check_branch
      %96 = sbr.rel (0) target = $region33
    $region32: #{inductive_gat_forward.1} parent=1 // pred_region
      _
    $region33: #{inductive_gat_forward.1} parent=1 // pred_fallthru
      _
    // Predicated region
    $region34: #{inductive_gat_forward.1} parent=1 // pred_check
      _
    $region35: #{inductive_gat_forward.1} parent=1 // pred_check_branch
      %98 = sbr.rel (0) target = $region37
    $region36: #{inductive_gat_forward.1} parent=1 // pred_region
      %100 = dma.done [#allocation3], 128
    $region37: #{inductive_gat_forward.1} parent=1 // pred_fallthru
      _
    // Predicated region
    $region38: #{inductive_gat_forward.1} parent=1 // pred_check
      _
    $region39: #{inductive_gat_forward.1} parent=1 // pred_check_branch
      %102 = sbr.rel (0) target = $region41
    $region40: #{inductive_gat_forward.1} parent=1 // pred_region
      %104 = dma.done [#allocation5], 256
    $region41: #{inductive_gat_forward.1} parent=1 // pred_fallthru
      _
    // Predicated region
    $region42: #{inductive_gat_forward.1} parent=1 // pred_check
      _
    $region43: #{inductive_gat_forward.1} parent=1 // pred_check_branch
      %106 = sbr.rel (0) target = $region45
    $region44: #{inductive_gat_forward.1} parent=1 // pred_region
      %108 = dma.done [#allocation5], 5120
    $region45: #{inductive_gat_forward.1} parent=1 // pred_fallthru
      _
    // Predicated region
    $region46: #{inductive_gat_forward.1} parent=1 // pred_check
      _
    $region47: #{inductive_gat_forward.1} parent=1 // pred_check_branch
      %110 = sbr.rel (0) target = $region49
    $region48: #{inductive_gat_forward.1} parent=1 // pred_region
      %112 = dma.done [#allocation8], 64
    $region49: #{inductive_gat_forward.1} parent=1 // pred_fallthru
      _
    // Predicated region
    $region50: #{inductive_gat_forward.1} parent=1 // pred_check
      _
    $region51: #{inductive_gat_forward.1} parent=1 // pred_check_branch
      %114 = sbr.rel (0) target = $region53
    $region52: #{inductive_gat_forward.1} parent=1 // pred_region
      %116 = dma.done [#allocation8], 20480
    $region53: #{inductive_gat_forward.1} parent=1 // pred_fallthru
      _
    // Predicated region
    $region54: #{inductive_gat_forward.1} parent=1 // pred_check
      _
    $region55: #{inductive_gat_forward.1} parent=1 // pred_check_branch
      %118 = sbr.rel (0) target = $region57
    $region56: #{inductive_gat_forward.1} parent=1 // pred_region
      %120 = dma.done [#allocation11], 8192
    $region57: #{inductive_gat_forward.1} parent=1 // pred_fallthru
      _
    %v122 = vld [vmem:[#allocation4] sm:$0xff]
    %v123 = vld [vmem:[#allocation4 + $0x8] sm:$0xff]
    %v124 = vld [vmem:[#allocation2] sm:$0xf]
    %v125 = vld [vmem:[#allocation2 + $0x4] sm:$0xf]
    %v126 = vld [vmem:[#allocation6] sm:$0xff]
    %v127 = vld [vmem:[#allocation6 + $0x8] sm:$0xff]
    %v128 = vld [vmem:[#allocation6 + $0x10] sm:$0xf]
    %v129 = vld [vmem:[#allocation6 + $0x14] sm:$0xff]
    %v130 = vld [vmem:[#allocation6 + $0x1c] sm:$0xff]
    %v131 = vld [vmem:[#allocation6 + $0x24] sm:$0xf]
    %v132 = vld [vmem:[#allocation6 + $0x28] sm:$0xff]
    %v133 = vld [vmem:[#allocation6 + $0x30] sm:$0xff]
    %v134 = vld [vmem:[#allocation6 + $0x38] sm:$0xf]
    %v135 = vld [vmem:[#allocation6 + $0x3c] sm:$0xff]
    %v136 = vld [vmem:[#allocation6 + $0x44] sm:$0xff]
    %v137 = vld [vmem:[#allocation6 + $0x4c] sm:$0xf]
    %v138 = vld [vmem:[#allocation6 + $0x50] sm:$0xff]
    %v139 = vld [vmem:[#allocation6 + $0x58] sm:$0xff]
    %v140 = vld [vmem:[#allocation6 + $0x60] sm:$0xf]
    %v141 = vld [vmem:[#allocation6 + $0x64] sm:$0xff]
    %v142 = vld [vmem:[#allocation6 + $0x6c] sm:$0xff]
    %v143 = vld [vmem:[#allocation6 + $0x74] sm:$0xf]
    %v144 = vld [vmem:[#allocation6 + $0x78] sm:$0xff]
    %v145 = vld [vmem:[#allocation6 + $0x80] sm:$0xff]
    %v146 = vld [vmem:[#allocation6 + $0x88] sm:$0xf]
    %v147 = vld [vmem:[#allocation6 + $0x8c] sm:$0xff]
    %v148 = vld [vmem:[#allocation6 + $0x94] sm:$0xff]
    %v149 = vld [vmem:[#allocation6 + $0x9c] sm:$0xf]
    %v150 = vld [vmem:[#allocation6 + $0xa0] sm:$0xff]
    %v151 = vld [vmem:[#allocation6 + $0xa8] sm:$0xff]
    %v152 = vld [vmem:[#allocation6 + $0xb0] sm:$0xf]
    %v153 = vld [vmem:[#allocation6 + $0xb4] sm:$0xff]
    %v154 = vld [vmem:[#allocation6 + $0xbc] sm:$0xff]
    %v155 = vld [vmem:[#allocation6 + $0xc4] sm:$0xf]
    %v156 = vld [vmem:[#allocation6 + $0xc8] sm:$0xff]
    %v157 = vld [vmem:[#allocation6 + $0xd0] sm:$0xff]
    %v158 = vld [vmem:[#allocation6 + $0xd8] sm:$0xf]
    %v159 = vld [vmem:[#allocation6 + $0xdc] sm:$0xff]
    %v160 = vld [vmem:[#allocation6 + $0xe4] sm:$0xff]
    %v161 = vld [vmem:[#allocation6 + $0xec] sm:$0xf]
    %v162 = vld [vmem:[#allocation6 + $0xf0] sm:$0xff]
    %v163 = vld [vmem:[#allocation6 + $0xf8] sm:$0xff]
    %v164 = vld [vmem:[#allocation6 + $0x100] sm:$0xf]
    %v165 = vld [vmem:[#allocation6 + $0x104] sm:$0xff]
    %v166 = vld [vmem:[#allocation6 + $0x10c] sm:$0xff]
    %v167 = vld [vmem:[#allocation6 + $0x114] sm:$0xf]
    %v168 = vld [vmem:[#allocation6 + $0x118] sm:$0xff]
    %v169 = vld [vmem:[#allocation6 + $0x120] sm:$0xff]
    %v170 = vld [vmem:[#allocation6 + $0x128] sm:$0xf]
    %v171 = vld [vmem:[#allocation6 + $0x12c] sm:$0xff]
    %v172 = vld [vmem:[#allocation6 + $0x134] sm:$0xff]
    %v173 = vld [vmem:[#allocation6 + $0x13c] sm:$0xf]
    %v176 = vunpack.c.l.b16 %v124
    %v177 = vunpack.c.l.b16 %v125
    %v178 = vpack.c.b16 %v177, %v176
    %v228 = vunpack.c.l.b16 %v126
    %v229 = vunpack.c.h.b16 %v126
    %v230 = vunpack.c.l.b16 %v127
    %v231 = vunpack.c.h.b16 %v127
    %v232 = vunpack.c.l.b16 %v128
    %v233 = vunpack.c.l.b16 %v129
    %v234 = vunpack.c.h.b16 %v129
    %v235 = vunpack.c.l.b16 %v130
    %v236 = vunpack.c.h.b16 %v130
    %v237 = vunpack.c.l.b16 %v131
    %v238 = vunpack.c.l.b16 %v132
    %v239 = vunpack.c.h.b16 %v132
    %v240 = vunpack.c.l.b16 %v133
    %v241 = vunpack.c.h.b16 %v133
    %v242 = vunpack.c.l.b16 %v134
    %v243 = vunpack.c.l.b16 %v135
    %v244 = vunpack.c.h.b16 %v135
    %v245 = vunpack.c.l.b16 %v136
    %v246 = vunpack.c.h.b16 %v136
    %v247 = vunpack.c.l.b16 %v137
    %v248 = vunpack.c.l.b16 %v138
    %v249 = vunpack.c.h.b16 %v138
    %v250 = vunpack.c.l.b16 %v139
    %v251 = vunpack.c.h.b16 %v139
    %v252 = vunpack.c.l.b16 %v140
    %v253 = vunpack.c.l.b16 %v141
    %v254 = vunpack.c.h.b16 %v141
    %v255 = vunpack.c.l.b16 %v142
    %v256 = vunpack.c.h.b16 %v142
    %v257 = vunpack.c.l.b16 %v143
    %v258 = vunpack.c.l.b16 %v144
    %v259 = vunpack.c.h.b16 %v144
    %v260 = vunpack.c.l.b16 %v145
    %v261 = vunpack.c.h.b16 %v145
    %v262 = vunpack.c.l.b16 %v146
    %v263 = vunpack.c.l.b16 %v147
    %v264 = vunpack.c.h.b16 %v147
    %v265 = vunpack.c.l.b16 %v148
    %v266 = vunpack.c.h.b16 %v148
    %v267 = vunpack.c.l.b16 %v149
    %v268 = vunpack.c.l.b16 %v150
    %v269 = vunpack.c.h.b16 %v150
    %v270 = vunpack.c.l.b16 %v151
    %v271 = vunpack.c.h.b16 %v151
    %v272 = vunpack.c.l.b16 %v152
    %v273 = vunpack.c.l.b16 %v153
    %v274 = vunpack.c.h.b16 %v153
    %v275 = vunpack.c.l.b16 %v154
    %v276 = vunpack.c.h.b16 %v154
    %v277 = vunpack.c.l.b16 %v155
    %v278 = vunpack.c.l.b16 %v156
    %v279 = vunpack.c.h.b16 %v156
    %v280 = vunpack.c.l.b16 %v157
    %v281 = vunpack.c.h.b16 %v157
    %v282 = vunpack.c.l.b16 %v158
    %v283 = vunpack.c.l.b16 %v159
    %v284 = vunpack.c.h.b16 %v159
    %v285 = vunpack.c.l.b16 %v160
    %v286 = vunpack.c.h.b16 %v160
    %v287 = vunpack.c.l.b16 %v161
    %v288 = vunpack.c.l.b16 %v162
    %v289 = vunpack.c.h.b16 %v162
    %v290 = vunpack.c.l.b16 %v163
    %v291 = vunpack.c.h.b16 %v163
    %v292 = vunpack.c.l.b16 %v164
    %v293 = vunpack.c.l.b16 %v165
    %v294 = vunpack.c.h.b16 %v165
    %v295 = vunpack.c.l.b16 %v166
    %v296 = vunpack.c.h.b16 %v166
    %v297 = vunpack.c.l.b16 %v167
    %v298 = vunpack.c.l.b16 %v168
    %v299 = vunpack.c.h.b16 %v168
    %v300 = vunpack.c.l.b16 %v169
    %v301 = vunpack.c.h.b16 %v169
    %v302 = vunpack.c.l.b16 %v170
    %v303 = vunpack.c.l.b16 %v171
    %v304 = vunpack.c.h.b16 %v171
    %v305 = vunpack.c.l.b16 %v172
    %v306 = vunpack.c.h.b16 %v172
    %v307 = vunpack.c.l.b16 %v173
    %v308 = vpack.c.b16 %v233, %v228
    %v309 = vpack.c.b16 %v234, %v229
    %v310 = vpack.c.b16 %v235, %v230
    %v311 = vpack.c.b16 %v236, %v231
    %v312 = vpack.c.b16 %v237, %v232
    %v313 = vpack.c.b16 %v243, %v238
    %v314 = vpack.c.b16 %v244, %v239
    %v315 = vpack.c.b16 %v245, %v240
    %v316 = vpack.c.b16 %v246, %v241
    %v317 = vpack.c.b16 %v247, %v242
    %v318 = vpack.c.b16 %v253, %v248
    %v319 = vpack.c.b16 %v254, %v249
    %v320 = vpack.c.b16 %v255, %v250
    %v321 = vpack.c.b16 %v256, %v251
    %v322 = vpack.c.b16 %v257, %v252
    %v323 = vpack.c.b16 %v263, %v258
    %v324 = vpack.c.b16 %v264, %v259
    %v325 = vpack.c.b16 %v265, %v260
    %v326 = vpack.c.b16 %v266, %v261
    %v327 = vpack.c.b16 %v267, %v262
    %v328 = vpack.c.b16 %v273, %v268
    %v329 = vpack.c.b16 %v274, %v269
    %v330 = vpack.c.b16 %v275, %v270
    %v331 = vpack.c.b16 %v276, %v271
    %v332 = vpack.c.b16 %v277, %v272
    %v333 = vpack.c.b16 %v283, %v278
    %v334 = vpack.c.b16 %v284, %v279
    %v335 = vpack.c.b16 %v285, %v280
    %v336 = vpack.c.b16 %v286, %v281
    %v337 = vpack.c.b16 %v287, %v282
    %v338 = vpack.c.b16 %v293, %v288
    %v339 = vpack.c.b16 %v294, %v289
    %v340 = vpack.c.b16 %v295, %v290
    %v341 = vpack.c.b16 %v296, %v291
    %v342 = vpack.c.b16 %v297, %v292
    %v343 = vpack.c.b16 %v303, %v298
    %v344 = vpack.c.b16 %v304, %v299
    %v345 = vpack.c.b16 %v305, %v300
    %v346 = vpack.c.b16 %v306, %v301
    %v347 = vpack.c.b16 %v307, %v302
    %388 = vmatpush.bf16.msra.mxu0 %v343
    %389 = vmatpush.bf16.msra.mxu0 %v338
    %390 = vmatpush.bf16.msra.mxu0 %v333
    %391 = vmatpush.bf16.msra.mxu0 %v328
    %392 = vmatpush.bf16.msra.mxu0 %v323
    %393 = vmatpush.bf16.msra.mxu0 %v318
    %394 = vmatpush.bf16.msra.mxu0 %v313
    %395 = vmatpush.bf16.msra.mxu0 %v308
    %396 = vmatmul.bf16.gmra.mxu0 %v178
    %v397 = vpop.f32.mrf.mxu0
    %v398 = vadd.f32 0.0, %v397
    %v399 = vpop.f32.mrf.mxu0
    %v400 = vadd.f32 0.0, %v399
    %401 = vdwg.mxu0
    %402 = vmatpush.bf16.msra.mxu0 %v344
    %403 = vmatpush.bf16.msra.mxu0 %v339
    %404 = vmatpush.bf16.msra.mxu0 %v334
    %405 = vmatpush.bf16.msra.mxu0 %v329
    %406 = vmatpush.bf16.msra.mxu0 %v324
    %407 = vmatpush.bf16.msra.mxu0 %v319
    %408 = vmatpush.bf16.msra.mxu0 %v314
    %409 = vmatpush.bf16.msra.mxu0 %v309
    %410 = vmatmul.bf16.gmra.mxu0 %v178
    %v411 = vpop.f32.mrf.mxu0
    %v412 = vadd.f32 0.0, %v411
    %v413 = vpop.f32.mrf.mxu0
    %v414 = vadd.f32 0.0, %v413
    %415 = vdwg.mxu0
    %416 = vmatpush.bf16.msra.mxu0 %v345
    %417 = vmatpush.bf16.msra.mxu0 %v340
    %418 = vmatpush.bf16.msra.mxu0 %v335
    %419 = vmatpush.bf16.msra.mxu0 %v330
    %420 = vmatpush.bf16.msra.mxu0 %v325
    %421 = vmatpush.bf16.msra.mxu0 %v320
    %422 = vmatpush.bf16.msra.mxu0 %v315
    %423 = vmatpush.bf16.msra.mxu0 %v310
    %424 = vmatmul.bf16.gmra.mxu0 %v178
    %v425 = vpop.f32.mrf.mxu0
    %v426 = vadd.f32 0.0, %v425
    %v427 = vpop.f32.mrf.mxu0
    %v428 = vadd.f32 0.0, %v427
    %429 = vdwg.mxu0
    %430 = vmatpush.bf16.msra.mxu0 %v346
    %431 = vmatpush.bf16.msra.mxu0 %v341
    %432 = vmatpush.bf16.msra.mxu0 %v336
    %433 = vmatpush.bf16.msra.mxu0 %v331
    %434 = vmatpush.bf16.msra.mxu0 %v326
    %435 = vmatpush.bf16.msra.mxu0 %v321
    %436 = vmatpush.bf16.msra.mxu0 %v316
    %437 = vmatpush.bf16.msra.mxu0 %v311
    %438 = vmatmul.bf16.gmra.mxu0 %v178
    %v439 = vpop.f32.mrf.mxu0
    %v440 = vadd.f32 0.0, %v439
    %v441 = vpop.f32.mrf.mxu0
    %v442 = vadd.f32 0.0, %v441
    %443 = vdwg.mxu0
    %444 = vmatpush.bf16.msra.mxu0 %v347
    %445 = vmatpush.bf16.msra.mxu0 %v342
    %446 = vmatpush.bf16.msra.mxu0 %v337
    %447 = vmatpush.bf16.msra.mxu0 %v332
    %448 = vmatpush.bf16.msra.mxu0 %v327
    %449 = vmatpush.bf16.msra.mxu0 %v322
    %450 = vmatpush.bf16.msra.mxu0 %v317
    %451 = vmatpush.bf16.msra.mxu0 %v312
    %452 = vmatmul.bf16.gmra.mxu0 %v178
    %v453 = vpop.f32.mrf.mxu0
    %v454 = vadd.f32 0.0, %v453
    %v455 = vpop.f32.mrf.mxu0
    %v456 = vadd.f32 0.0, %v455
    %457 = vdwg.mxu0
    %458 = vxpose.xlu0.b32.start [1/16] %v454, 128
    %459 = vxpose.xlu0.b32.cont [2/16] %v456, 128
    %460 = vxpose.xlu0.b32.cont [3/16] 0.0, 128
    %461 = vxpose.xlu0.b32.cont [4/16] 0.0, 128
    %462 = vxpose.xlu0.b32.cont [5/16] 0.0, 128
    %463 = vxpose.xlu0.b32.cont [6/16] 0.0, 128
    %464 = vxpose.xlu0.b32.cont [7/16] 0.0, 128
    %465 = vxpose.xlu0.b32.cont [8/16] 0.0, 128
    %466 = vxpose.xlu0.b32.cont [9/16] 0.0, 128
    %467 = vxpose.xlu0.b32.cont [10/16] 0.0, 128
    %468 = vxpose.xlu0.b32.cont [11/16] 0.0, 128
    %469 = vxpose.xlu0.b32.cont [12/16] 0.0, 128
    %470 = vxpose.xlu0.b32.cont [13/16] 0.0, 128
    %471 = vxpose.xlu0.b32.cont [14/16] 0.0, 128
    %472 = vxpose.xlu0.b32.cont [15/16] 0.0, 128
    %473 = vxpose.xlu0.b32.end [16/16] 0.0, 128
    %v474 = vpop.trf.xlu0
    %v475 = vpop.trf.xlu0
    %v476 = vpop.trf.xlu0
    %v477 = vpop.trf.xlu0
    %v478 = vpop.trf.xlu0
    %v479 = vpop.trf.xlu0
    %v480 = vpop.trf.xlu0
    %v481 = vpop.trf.xlu0
    %v482 = vpop.trf.xlu0
    %v483 = vpop.trf.xlu0
    %v484 = vpop.trf.xlu0
    %v485 = vpop.trf.xlu0
    %v486 = vpop.trf.xlu0
    %v487 = vpop.trf.xlu0
    %v488 = vpop.trf.xlu0
    %v489 = vpop.trf.xlu0
    %491 = vset.pattern.permute.xlu0 1
    %492 = vperm.xlu0 %491, %v454
    %v493 = vpop.permute.xlu0 %492
    %496 = vset.pattern.permute.xlu0 1
    %497 = vperm.xlu0 %496, %v456
    %v498 = vpop.permute.xlu0 %497
    %v500 = vperm.slane %v474, 0
    %v501 = vadd.f32 %v493, %v500
    %v502 = vadd.f32 %v498, %v500
    %503 = vrot.lane.b32.xlu0 %v454, 126
    %v504 = vpop.permute.xlu0 %503
    %505 = vrot.lane.b32.xlu0 %v456, 126
    %v506 = vpop.permute.xlu0 %505
    %509 = vxpose.xlu0.b32.start [1/16] %v504, 128
    %510 = vxpose.xlu0.b32.cont [2/16] %v506, 128
    %511 = vxpose.xlu0.b32.cont [3/16] 0.0, 128
    %512 = vxpose.xlu0.b32.cont [4/16] 0.0, 128
    %513 = vxpose.xlu0.b32.cont [5/16] 0.0, 128
    %514 = vxpose.xlu0.b32.cont [6/16] 0.0, 128
    %515 = vxpose.xlu0.b32.cont [7/16] 0.0, 128
    %516 = vxpose.xlu0.b32.cont [8/16] 0.0, 128
    %517 = vxpose.xlu0.b32.cont [9/16] 0.0, 128
    %518 = vxpose.xlu0.b32.cont [10/16] 0.0, 128
    %519 = vxpose.xlu0.b32.cont [11/16] 0.0, 128
    %520 = vxpose.xlu0.b32.cont [12/16] 0.0, 128
    %521 = vxpose.xlu0.b32.cont [13/16] 0.0, 128
    %522 = vxpose.xlu0.b32.cont [14/16] 0.0, 128
    %523 = vxpose.xlu0.b32.cont [15/16] 0.0, 128
    %524 = vxpose.xlu0.b32.end [16/16] 0.0, 128
    %v525 = vpop.trf.xlu0
    %v526 = vpop.trf.xlu0
    %v527 = vpop.trf.xlu0
    %v528 = vpop.trf.xlu0
    %v529 = vpop.trf.xlu0
    %v530 = vpop.trf.xlu0
    %v531 = vpop.trf.xlu0
    %v532 = vpop.trf.xlu0
    %v533 = vpop.trf.xlu0
    %v534 = vpop.trf.xlu0
    %v535 = vpop.trf.xlu0
    %v536 = vpop.trf.xlu0
    %v537 = vpop.trf.xlu0
    %v538 = vpop.trf.xlu0
    %v539 = vpop.trf.xlu0
    %v540 = vpop.trf.xlu0
    %541 = vset.pattern.permute.xlu0 3
    %542 = vperm.xlu0 %541, %v454
    %v543 = vpop.permute.xlu0 %542
    %545 = vset.pattern.permute.xlu0 3
    %546 = vperm.xlu0 %545, %v456
    %v547 = vpop.permute.xlu0 %546
    %v549 = vperm.slane %v525, 0
    %v550 = vadd.f32 %v543, %v549
    %v551 = vadd.f32 %v547, %v549
    %v552 = vmul.f32 %v501, 0.2
    %v553 = vmul.f32 %v502, 0.2
    %v554 = vmul.f32 %v550, 0.2
    %v555 = vmul.f32 %v551, 0.2
    %v556 = vmax.f32 %v501, %v552
    %v557 = vmax.f32 %v502, %v553
    %v558 = vmax.f32 %v550, %v554
    %v559 = vmax.f32 %v551, %v555
    %v560 = vadd.f32 %v556, %v122
    %v561 = vadd.f32 %v557, %v123
    %v562 = vadd.f32 %v558, %v122
    %v563 = vadd.f32 %v559, %v123
    %vm564 = vcmask 130048
    %v565 = vsel %vm564, %v560, -inf
    %566 = vmax.xlane.f32.xlu0 %v565
    %v567 = vpop.xlane.xlu0 %566
    %v568 = vsel %vm564, %v561, -inf
    %569 = vmax.xlane.f32.xlu0 %v568
    %v570 = vpop.xlane.xlu0 %569
    %v571 = vsel %vm564, %v562, -inf
    %572 = vmax.xlane.f32.xlu0 %v571
    %v573 = vpop.xlane.xlu0 %572
    %v574 = vsel %vm564, %v563, -inf
    %575 = vmax.xlane.f32.xlu0 %v574
    %v576 = vpop.xlane.xlu0 %575
    %v577 = vsub.f32 %v560, %v567
    %v578 = vsub.f32 %v561, %v570
    %v579 = vsub.f32 %v562, %v573
    %v580 = vsub.f32 %v563, %v576
    %v581 = vmul.f32 %v577, 1.442695
    %v582 = vpow.pop %v581
    %v583 = vmul.f32 %v578, 1.442695
    %v584 = vpow.pop %v583
    %v585 = vmul.f32 %v579, 1.442695
    %v586 = vpow.pop %v585
    %v587 = vmul.f32 %v580, 1.442695
    %v588 = vpow.pop %v587
    %v589 = vsel %vm564, %v582, 0.0
    %590 = vadd.xlane.f32.xlu0 %v589
    %v591 = vpop.xlane.xlu0 %590
    %v592 = vsel %vm564, %v584, 0.0
    %593 = vadd.xlane.f32.xlu0 %v592
    %v594 = vpop.xlane.xlu0 %593
    %v595 = vsel %vm564, %v586, 0.0
    %596 = vadd.xlane.f32.xlu0 %v595
    %v597 = vpop.xlane.xlu0 %596
    %v598 = vsel %vm564, %v588, 0.0
    %599 = vadd.xlane.f32.xlu0 %v598
    %v600 = vpop.xlane.xlu0 %599
    %v601 = vrcp.pop %v591
    %v602 = vrcp.pop %v594
    %v603 = vrcp.pop %v597
    %v604 = vrcp.pop %v600
    %v605 = vmul.f32 %v582, %v601
    %v606 = vmul.f32 %v584, %v602
    %v607 = vmul.f32 %v586, %v603
    %v608 = vmul.f32 %v588, %v604
    %v609 = vpack.c.bf16 %v605, %v605
    %v610 = vpack.c.bf16 %v606, %v606
    %v611 = vpack.c.bf16 %v607, %v607
    %v612 = vpack.c.bf16 %v608, %v608
    %v613 = vpack.c.bf16 %v400, %v398
    %v614 = vpack.c.bf16 %v414, %v412
    %v617 = vunpack.c.l.b16 %v609
    %v618 = vunpack.c.l.b16 %v610
    %v619 = vpack.c.b16 %v618, %v617
    %v621 = vsel %vm564, %v619, 0
    %623 = vmatpush.bf16.msra.mxu0 0
    %624 = vmatpush.bf16.msra.mxu0 0
    %625 = vmatpush.bf16.msra.mxu0 0
    %626 = vmatpush.bf16.msra.mxu0 0
    %627 = vmatpush.bf16.msra.mxu0 0
    %628 = vmatpush.bf16.msra.mxu0 0
    %629 = vmatpush.bf16.msra.mxu0 0
    %630 = vmatpush.bf16.msra.mxu0 %v613
    %631 = vmatmul.bf16.gmra.mxu0 %v621
    %v632 = vpop.f32.mrf.mxu0
    %v633 = vadd.f32 0.0, %v632
    %v634 = vpop.f32.mrf.mxu0
    %v635 = vadd.f32 0.0, %v634
    %636 = vdwg.mxu0
    %637 = vmatpush.bf16.msra.mxu0 0
    %638 = vmatpush.bf16.msra.mxu0 0
    %639 = vmatpush.bf16.msra.mxu0 0
    %640 = vmatpush.bf16.msra.mxu0 0
    %641 = vmatpush.bf16.msra.mxu0 0
    %642 = vmatpush.bf16.msra.mxu0 0
    %643 = vmatpush.bf16.msra.mxu0 0
    %644 = vmatpush.bf16.msra.mxu0 %v614
    %645 = vmatmul.bf16.gmra.mxu0 %v621
    %v646 = vpop.f32.mrf.mxu0
    %v647 = vadd.f32 0.0, %v646
    %v648 = vpop.f32.mrf.mxu0
    %v649 = vadd.f32 0.0, %v648
    %650 = vdwg.mxu0
    %v651 = vpack.c.bf16 %v428, %v426
    %v652 = vpack.c.bf16 %v442, %v440
    %v655 = vunpack.c.l.b16 %v611
    %v656 = vunpack.c.l.b16 %v612
    %v657 = vpack.c.b16 %v656, %v655
    %v659 = vsel %vm564, %v657, 0
    %661 = vmatpush.bf16.msra.mxu0 0
    %662 = vmatpush.bf16.msra.mxu0 0
    %663 = vmatpush.bf16.msra.mxu0 0
    %664 = vmatpush.bf16.msra.mxu0 0
    %665 = vmatpush.bf16.msra.mxu0 0
    %666 = vmatpush.bf16.msra.mxu0 0
    %667 = vmatpush.bf16.msra.mxu0 0
    %668 = vmatpush.bf16.msra.mxu0 %v651
    %669 = vmatmul.bf16.gmra.mxu0 %v659
    %v670 = vpop.f32.mrf.mxu0
    %v671 = vadd.f32 0.0, %v670
    %v672 = vpop.f32.mrf.mxu0
    %v673 = vadd.f32 0.0, %v672
    %674 = vdwg.mxu0
    %675 = vmatpush.bf16.msra.mxu0 0
    %676 = vmatpush.bf16.msra.mxu0 0
    %677 = vmatpush.bf16.msra.mxu0 0
    %678 = vmatpush.bf16.msra.mxu0 0
    %679 = vmatpush.bf16.msra.mxu0 0
    %680 = vmatpush.bf16.msra.mxu0 0
    %681 = vmatpush.bf16.msra.mxu0 0
    %682 = vmatpush.bf16.msra.mxu0 %v652
    %683 = vmatmul.bf16.gmra.mxu0 %v659
    %v684 = vpop.f32.mrf.mxu0
    %v685 = vadd.f32 0.0, %v684
    %v686 = vpop.f32.mrf.mxu0
    %v687 = vadd.f32 0.0, %v686
    %688 = vdwg.mxu0
    %v689 = vld [vmem:[#allocation7] sm:$0xf]
    %v691 = vperm.slane %v689, 0
    %v692 = vperm.slane %v689, 1
    %v693 = vperm.slane %v689, 2
    %v694 = vperm.slane %v689, 3
    %v699 = vadd.f32 %v633, %v691
    %v700 = vadd.f32 %v647, %v692
    %v701 = vadd.f32 %v671, %v693
    %v702 = vadd.f32 %v685, %v694
    %v703 = vadd.f32 %v635, %v691
    %v704 = vadd.f32 %v649, %v692
    %v705 = vadd.f32 %v673, %v693
    %v706 = vadd.f32 %v687, %v694
    %vm707 = vcmp.gt.f32.partialorder %v699, 0.0
    %vm708 = vcmp.gt.f32.partialorder %v700, 0.0
    %vm709 = vcmp.gt.f32.partialorder %v701, 0.0
    %vm710 = vcmp.gt.f32.partialorder %v702, 0.0
    %vm711 = vcmp.gt.f32.partialorder %v703, 0.0
    %vm712 = vcmp.gt.f32.partialorder %v704, 0.0
    %vm713 = vcmp.gt.f32.partialorder %v705, 0.0
    %vm714 = vcmp.gt.f32.partialorder %v706, 0.0
    %v715 = vmul.f32 %v699, 1.442695
    %v716 = vpow.pop %v715
    %v717 = vmul.f32 %v700, 1.442695
    %v718 = vpow.pop %v717
    %v719 = vmul.f32 %v701, 1.442695
    %v720 = vpow.pop %v719
    %v721 = vmul.f32 %v702, 1.442695
    %v722 = vpow.pop %v721
    %v723 = vmul.f32 %v703, 1.442695
    %v724 = vpow.pop %v723
    %v725 = vmul.f32 %v704, 1.442695
    %v726 = vpow.pop %v725
    %v727 = vmul.f32 %v705, 1.442695
    %v728 = vpow.pop %v727
    %v729 = vmul.f32 %v706, 1.442695
    %v730 = vpow.pop %v729
    %v731 = vsub.f32 %v716, 1.0
    %v732 = vsub.f32 %v718, 1.0
    %v733 = vsub.f32 %v720, 1.0
    %v734 = vsub.f32 %v722, 1.0
    %v735 = vsub.f32 %v724, 1.0
    %v736 = vsub.f32 %v726, 1.0
    %v737 = vsub.f32 %v728, 1.0
    %v738 = vsub.f32 %v730, 1.0
    %v739 = vsel %vm707, %v699, %v731
    %v740 = vsel %vm708, %v700, %v732
    %v741 = vsel %vm709, %v701, %v733
    %v742 = vsel %vm710, %v702, %v734
    %v743 = vsel %vm711, %v703, %v735
    %v744 = vsel %vm712, %v704, %v736
    %v745 = vsel %vm713, %v705, %v737
    %v746 = vsel %vm714, %v706, %v738
    %v747 = vpack.c.bf16 %v743, %v739
    %v748 = vpack.c.bf16 %v744, %v740
    %v749 = vpack.c.bf16 %v745, %v741
    %v750 = vpack.c.bf16 %v746, %v742
    %v751 = vld [vmem:[#allocation9] sm:$0xff]
    %v752 = vld [vmem:[#allocation9 + $0x8] sm:$0xff]
    %v753 = vld [vmem:[#allocation9 + $0x10] sm:$0xf]
    %v754 = vld [vmem:[#allocation9 + $0x14] sm:$0xff]
    %v755 = vld [vmem:[#allocation9 + $0x1c] sm:$0xff]
    %v756 = vld [vmem:[#allocation9 + $0x24] sm:$0xf]
    %v757 = vld [vmem:[#allocation9 + $0x28] sm:$0xff]
    %v758 = vld [vmem:[#allocation9 + $0x30] sm:$0xff]
    %v759 = vld [vmem:[#allocation9 + $0x38] sm:$0xf]
    %v760 = vld [vmem:[#allocation9 + $0x3c] sm:$0xff]
    %v761 = vld [vmem:[#allocation9 + $0x44] sm:$0xff]
    %v762 = vld [vmem:[#allocation9 + $0x4c] sm:$0xf]
    %v763 = vld [vmem:[#allocation9 + $0x50] sm:$0xff]
    %v764 = vld [vmem:[#allocation9 + $0x58] sm:$0xff]
    %v765 = vld [vmem:[#allocation9 + $0x60] sm:$0xf]
    %v766 = vld [vmem:[#allocation9 + $0x64] sm:$0xff]
    %v767 = vld [vmem:[#allocation9 + $0x6c] sm:$0xff]
    %v768 = vld [vmem:[#allocation9 + $0x74] sm:$0xf]
    %v769 = vld [vmem:[#allocation9 + $0x78] sm:$0xff]
    %v770 = vld [vmem:[#allocation9 + $0x80] sm:$0xff]
    %v771 = vld [vmem:[#allocation9 + $0x88] sm:$0xf]
    %v772 = vld [vmem:[#allocation9 + $0x8c] sm:$0xff]
    %v773 = vld [vmem:[#allocation9 + $0x94] sm:$0xff]
    %v774 = vld [vmem:[#allocation9 + $0x9c] sm:$0xf]
    %v775 = vld [vmem:[#allocation9 + $0xa0] sm:$0xff]
    %v776 = vld [vmem:[#allocation9 + $0xa8] sm:$0xff]
    %v777 = vld [vmem:[#allocation9 + $0xb0] sm:$0xf]
    %v778 = vld [vmem:[#allocation9 + $0xb4] sm:$0xff]
    %v779 = vld [vmem:[#allocation9 + $0xbc] sm:$0xff]
    %v780 = vld [vmem:[#allocation9 + $0xc4] sm:$0xf]
    %v781 = vld [vmem:[#allocation9 + $0xc8] sm:$0xff]
    %v782 = vld [vmem:[#allocation9 + $0xd0] sm:$0xff]
    %v783 = vld [vmem:[#allocation9 + $0xd8] sm:$0xf]
    %v784 = vld [vmem:[#allocation9 + $0xdc] sm:$0xff]
    %v785 = vld [vmem:[#allocation9 + $0xe4] sm:$0xff]
    %v786 = vld [vmem:[#allocation9 + $0xec] sm:$0xf]
    %v787 = vld [vmem:[#allocation9 + $0xf0] sm:$0xff]
    %v788 = vld [vmem:[#allocation9 + $0xf8] sm:$0xff]
    %v789 = vld [vmem:[#allocation9 + $0x100] sm:$0xf]
    %v790 = vld [vmem:[#allocation9 + $0x104] sm:$0xff]
    %v791 = vld [vmem:[#allocation9 + $0x10c] sm:$0xff]
    %v792 = vld [vmem:[#allocation9 + $0x114] sm:$0xf]
    %v793 = vld [vmem:[#allocation9 + $0x118] sm:$0xff]
    %v794 = vld [vmem:[#allocation9 + $0x120] sm:$0xff]
    %v795 = vld [vmem:[#allocation9 + $0x128] sm:$0xf]
    %v796 = vld [vmem:[#allocation9 + $0x12c] sm:$0xff]
    %v797 = vld [vmem:[#allocation9 + $0x134] sm:$0xff]
    %v798 = vld [vmem:[#allocation9 + $0x13c] sm:$0xf]
    %v799 = vld [vmem:[#allocation9 + $0x140] sm:$0xff]
    %v800 = vld [vmem:[#allocation9 + $0x148] sm:$0xff]
    %v801 = vld [vmem:[#allocation9 + $0x150] sm:$0xf]
    %v802 = vld [vmem:[#allocation9 + $0x154] sm:$0xff]
    %v803 = vld [vmem:[#allocation9 + $0x15c] sm:$0xff]
    %v804 = vld [vmem:[#allocation9 + $0x164] sm:$0xf]
    %v805 = vld [vmem:[#allocation9 + $0x168] sm:$0xff]
    %v806 = vld [vmem:[#allocation9 + $0x170] sm:$0xff]
    %v807 = vld [vmem:[#allocation9 + $0x178] sm:$0xf]
    %v808 = vld [vmem:[#allocation9 + $0x17c] sm:$0xff]
    %v809 = vld [vmem:[#allocation9 + $0x184] sm:$0xff]
    %v810 = vld [vmem:[#allocation9 + $0x18c] sm:$0xf]
    %v811 = vld [vmem:[#allocation9 + $0x190] sm:$0xff]
    %v812 = vld [vmem:[#allocation9 + $0x198] sm:$0xff]
    %v813 = vld [vmem:[#allocation9 + $0x1a0] sm:$0xf]
    %v814 = vld [vmem:[#allocation9 + $0x1a4] sm:$0xff]
    %v815 = vld [vmem:[#allocation9 + $0x1ac] sm:$0xff]
    %v816 = vld [vmem:[#allocation9 + $0x1b4] sm:$0xf]
    %v817 = vld [vmem:[#allocation9 + $0x1b8] sm:$0xff]
    %v818 = vld [vmem:[#allocation9 + $0x1c0] sm:$0xff]
    %v819 = vld [vmem:[#allocation9 + $0x1c8] sm:$0xf]
    %v820 = vld [vmem:[#allocation9 + $0x1cc] sm:$0xff]
    %v821 = vld [vmem:[#allocation9 + $0x1d4] sm:$0xff]
    %v822 = vld [vmem:[#allocation9 + $0x1dc] sm:$0xf]
    %v823 = vld [vmem:[#allocation9 + $0x1e0] sm:$0xff]
    %v824 = vld [vmem:[#allocation9 + $0x1e8] sm:$0xff]
    %v825 = vld [vmem:[#allocation9 + $0x1f0] sm:$0xf]
    %v826 = vld [vmem:[#allocation9 + $0x1f4] sm:$0xff]
    %v827 = vld [vmem:[#allocation9 + $0x1fc] sm:$0xff]
    %v828 = vld [vmem:[#allocation9 + $0x204] sm:$0xf]
    %v829 = vld [vmem:[#allocation9 + $0x208] sm:$0xff]
    %v830 = vld [vmem:[#allocation9 + $0x210] sm:$0xff]
    %v831 = vld [vmem:[#allocation9 + $0x218] sm:$0xf]
    %v832 = vld [vmem:[#allocation9 + $0x21c] sm:$0xff]
    %v833 = vld [vmem:[#allocation9 + $0x224] sm:$0xff]
    %v834 = vld [vmem:[#allocation9 + $0x22c] sm:$0xf]
    %v835 = vld [vmem:[#allocation9 + $0x230] sm:$0xff]
    %v836 = vld [vmem:[#allocation9 + $0x238] sm:$0xff]
    %v837 = vld [vmem:[#allocation9 + $0x240] sm:$0xf]
    %v838 = vld [vmem:[#allocation9 + $0x244] sm:$0xff]
    %v839 = vld [vmem:[#allocation9 + $0x24c] sm:$0xff]
    %v840 = vld [vmem:[#allocation9 + $0x254] sm:$0xf]
    %v841 = vld [vmem:[#allocation9 + $0x258] sm:$0xff]
    %v842 = vld [vmem:[#allocation9 + $0x260] sm:$0xff]
    %v843 = vld [vmem:[#allocation9 + $0x268] sm:$0xf]
    %v844 = vld [vmem:[#allocation9 + $0x26c] sm:$0xff]
    %v845 = vld [vmem:[#allocation9 + $0x274] sm:$0xff]
    %v846 = vld [vmem:[#allocation9 + $0x27c] sm:$0xf]
    %v847 = vld [vmem:[#allocation9 + $0x280] sm:$0xff]
    %v848 = vld [vmem:[#allocation9 + $0x288] sm:$0xff]
    %v849 = vld [vmem:[#allocation9 + $0x290] sm:$0xf]
    %v850 = vld [vmem:[#allocation9 + $0x294] sm:$0xff]
    %v851 = vld [vmem:[#allocation9 + $0x29c] sm:$0xff]
    %v852 = vld [vmem:[#allocation9 + $0x2a4] sm:$0xf]
    %v853 = vld [vmem:[#allocation9 + $0x2a8] sm:$0xff]
    %v854 = vld [vmem:[#allocation9 + $0x2b0] sm:$0xff]
    %v855 = vld [vmem:[#allocation9 + $0x2b8] sm:$0xf]
    %v856 = vld [vmem:[#allocation9 + $0x2bc] sm:$0xff]
    %v857 = vld [vmem:[#allocation9 + $0x2c4] sm:$0xff]
    %v858 = vld [vmem:[#allocation9 + $0x2cc] sm:$0xf]
    %v859 = vld [vmem:[#allocation9 + $0x2d0] sm:$0xff]
    %v860 = vld [vmem:[#allocation9 + $0x2d8] sm:$0xff]
    %v861 = vld [vmem:[#allocation9 + $0x2e0] sm:$0xf]
    %v862 = vld [vmem:[#allocation9 + $0x2e4] sm:$0xff]
    %v863 = vld [vmem:[#allocation9 + $0x2ec] sm:$0xff]
    %v864 = vld [vmem:[#allocation9 + $0x2f4] sm:$0xf]
    %v865 = vld [vmem:[#allocation9 + $0x2f8] sm:$0xff]
    %v866 = vld [vmem:[#allocation9 + $0x300] sm:$0xff]
    %v867 = vld [vmem:[#allocation9 + $0x308] sm:$0xf]
    %v868 = vld [vmem:[#allocation9 + $0x30c] sm:$0xff]
    %v869 = vld [vmem:[#allocation9 + $0x314] sm:$0xff]
    %v870 = vld [vmem:[#allocation9 + $0x31c] sm:$0xf]
    %v871 = vld [vmem:[#allocation9 + $0x320] sm:$0xff]
    %v872 = vld [vmem:[#allocation9 + $0x328] sm:$0xff]
    %v873 = vld [vmem:[#allocation9 + $0x330] sm:$0xf]
    %v874 = vld [vmem:[#allocation9 + $0x334] sm:$0xff]
    %v875 = vld [vmem:[#allocation9 + $0x33c] sm:$0xff]
    %v876 = vld [vmem:[#allocation9 + $0x344] sm:$0xf]
    %v877 = vld [vmem:[#allocation9 + $0x348] sm:$0xff]
    %v878 = vld [vmem:[#allocation9 + $0x350] sm:$0xff]
    %v879 = vld [vmem:[#allocation9 + $0x358] sm:$0xf]
    %v880 = vld [vmem:[#allocation9 + $0x35c] sm:$0xff]
    %v881 = vld [vmem:[#allocation9 + $0x364] sm:$0xff]
    %v882 = vld [vmem:[#allocation9 + $0x36c] sm:$0xf]
    %v883 = vld [vmem:[#allocation9 + $0x370] sm:$0xff]
    %v884 = vld [vmem:[#allocation9 + $0x378] sm:$0xff]
    %v885 = vld [vmem:[#allocation9 + $0x380] sm:$0xf]
    %v886 = vld [vmem:[#allocation9 + $0x384] sm:$0xff]
    %v887 = vld [vmem:[#allocation9 + $0x38c] sm:$0xff]
    %v888 = vld [vmem:[#allocation9 + $0x394] sm:$0xf]
    %v889 = vld [vmem:[#allocation9 + $0x398] sm:$0xff]
    %v890 = vld [vmem:[#allocation9 + $0x3a0] sm:$0xff]
    %v891 = vld [vmem:[#allocation9 + $0x3a8] sm:$0xf]
    %v892 = vld [vmem:[#allocation9 + $0x3ac] sm:$0xff]
    %v893 = vld [vmem:[#allocation9 + $0x3b4] sm:$0xff]
    %v894 = vld [vmem:[#allocation9 + $0x3bc] sm:$0xf]
    %v895 = vld [vmem:[#allocation9 + $0x3c0] sm:$0xff]
    %v896 = vld [vmem:[#allocation9 + $0x3c8] sm:$0xff]
    %v897 = vld [vmem:[#allocation9 + $0x3d0] sm:$0xf]
    %v898 = vld [vmem:[#allocation9 + $0x3d4] sm:$0xff]
    %v899 = vld [vmem:[#allocation9 + $0x3dc] sm:$0xff]
    %v900 = vld [vmem:[#allocation9 + $0x3e4] sm:$0xf]
    %v901 = vld [vmem:[#allocation9 + $0x3e8] sm:$0xff]
    %v902 = vld [vmem:[#allocation9 + $0x3f0] sm:$0xff]
    %v903 = vld [vmem:[#allocation9 + $0x3f8] sm:$0xf]
    %v904 = vld [vmem:[#allocation9 + $0x3fc] sm:$0xff]
    %v905 = vld [vmem:[#allocation9 + $0x404] sm:$0xff]
    %v906 = vld [vmem:[#allocation9 + $0x40c] sm:$0xf]
    %v907 = vld [vmem:[#allocation9 + $0x410] sm:$0xff]
    %v908 = vld [vmem:[#allocation9 + $0x418] sm:$0xff]
    %v909 = vld [vmem:[#allocation9 + $0x420] sm:$0xf]
    %v910 = vld [vmem:[#allocation9 + $0x424] sm:$0xff]
    %v911 = vld [vmem:[#allocation9 + $0x42c] sm:$0xff]
    %v912 = vld [vmem:[#allocation9 + $0x434] sm:$0xf]
    %v913 = vld [vmem:[#allocation9 + $0x438] sm:$0xff]
    %v914 = vld [vmem:[#allocation9 + $0x440] sm:$0xff]
    %v915 = vld [vmem:[#allocation9 + $0x448] sm:$0xf]
    %v916 = vld [vmem:[#allocation9 + $0x44c] sm:$0xff]
    %v917 = vld [vmem:[#allocation9 + $0x454] sm:$0xff]
    %v918 = vld [vmem:[#allocation9 + $0x45c] sm:$0xf]
    %v919 = vld [vmem:[#allocation9 + $0x460] sm:$0xff]
    %v920 = vld [vmem:[#allocation9 + $0x468] sm:$0xff]
    %v921 = vld [vmem:[#allocation9 + $0x470] sm:$0xf]
    %v922 = vld [vmem:[#allocation9 + $0x474] sm:$0xff]
    %v923 = vld [vmem:[#allocation9 + $0x47c] sm:$0xff]
    %v924 = vld [vmem:[#allocation9 + $0x484] sm:$0xf]
    %v925 = vld [vmem:[#allocation9 + $0x488] sm:$0xff]
    %v926 = vld [vmem:[#allocation9 + $0x490] sm:$0xff]
    %v927 = vld [vmem:[#allocation9 + $0x498] sm:$0xf]
    %v928 = vld [vmem:[#allocation9 + $0x49c] sm:$0xff]
    %v929 = vld [vmem:[#allocation9 + $0x4a4] sm:$0xff]
    %v930 = vld [vmem:[#allocation9 + $0x4ac] sm:$0xf]
    %v931 = vld [vmem:[#allocation9 + $0x4b0] sm:$0xff]
    %v932 = vld [vmem:[#allocation9 + $0x4b8] sm:$0xff]
    %v933 = vld [vmem:[#allocation9 + $0x4c0] sm:$0xf]
    %v934 = vld [vmem:[#allocation9 + $0x4c4] sm:$0xff]
    %v935 = vld [vmem:[#allocation9 + $0x4cc] sm:$0xff]
    %v936 = vld [vmem:[#allocation9 + $0x4d4] sm:$0xf]
    %v937 = vld [vmem:[#allocation9 + $0x4d8] sm:$0xff]
    %v938 = vld [vmem:[#allocation9 + $0x4e0] sm:$0xff]
    %v939 = vld [vmem:[#allocation9 + $0x4e8] sm:$0xf]
    %v940 = vld [vmem:[#allocation9 + $0x4ec] sm:$0xff]
    %v941 = vld [vmem:[#allocation9 + $0x4f4] sm:$0xff]
    %v942 = vld [vmem:[#allocation9 + $0x4fc] sm:$0xf]
    %v1135 = vunpack.c.l.b16 %v751
    %v1136 = vunpack.c.h.b16 %v751
    %v1137 = vunpack.c.l.b16 %v752
    %v1138 = vunpack.c.h.b16 %v752
    %v1139 = vunpack.c.l.b16 %v753
    %v1140 = vunpack.c.l.b16 %v754
    %v1141 = vunpack.c.h.b16 %v754
    %v1142 = vunpack.c.l.b16 %v755
    %v1143 = vunpack.c.h.b16 %v755
    %v1144 = vunpack.c.l.b16 %v756
    %v1145 = vunpack.c.l.b16 %v757
    %v1146 = vunpack.c.h.b16 %v757
    %v1147 = vunpack.c.l.b16 %v758
    %v1148 = vunpack.c.h.b16 %v758
    %v1149 = vunpack.c.l.b16 %v759
    %v1150 = vunpack.c.l.b16 %v760
    %v1151 = vunpack.c.h.b16 %v760
    %v1152 = vunpack.c.l.b16 %v761
    %v1153 = vunpack.c.h.b16 %v761
    %v1154 = vunpack.c.l.b16 %v762
    %v1155 = vunpack.c.l.b16 %v763
    %v1156 = vunpack.c.h.b16 %v763
    %v1157 = vunpack.c.l.b16 %v764
    %v1158 = vunpack.c.h.b16 %v764
    %v1159 = vunpack.c.l.b16 %v765
    %v1160 = vunpack.c.l.b16 %v766
    %v1161 = vunpack.c.h.b16 %v766
    %v1162 = vunpack.c.l.b16 %v767
    %v1163 = vunpack.c.h.b16 %v767
    %v1164 = vunpack.c.l.b16 %v768
    %v1165 = vunpack.c.l.b16 %v769
    %v1166 = vunpack.c.h.b16 %v769
    %v1167 = vunpack.c.l.b16 %v770
    %v1168 = vunpack.c.h.b16 %v770
    %v1169 = vunpack.c.l.b16 %v771
    %v1170 = vunpack.c.l.b16 %v772
    %v1171 = vunpack.c.h.b16 %v772
    %v1172 = vunpack.c.l.b16 %v773
    %v1173 = vunpack.c.h.b16 %v773
    %v1174 = vunpack.c.l.b16 %v774
    %v1175 = vunpack.c.l.b16 %v775
    %v1176 = vunpack.c.h.b16 %v775
    %v1177 = vunpack.c.l.b16 %v776
    %v1178 = vunpack.c.h.b16 %v776
    %v1179 = vunpack.c.l.b16 %v777
    %v1180 = vunpack.c.l.b16 %v778
    %v1181 = vunpack.c.h.b16 %v778
    %v1182 = vunpack.c.l.b16 %v779
    %v1183 = vunpack.c.h.b16 %v779
    %v1184 = vunpack.c.l.b16 %v780
    %v1185 = vunpack.c.l.b16 %v781
    %v1186 = vunpack.c.h.b16 %v781
    %v1187 = vunpack.c.l.b16 %v782
    %v1188 = vunpack.c.h.b16 %v782
    %v1189 = vunpack.c.l.b16 %v783
    %v1190 = vunpack.c.l.b16 %v784
    %v1191 = vunpack.c.h.b16 %v784
    %v1192 = vunpack.c.l.b16 %v785
    %v1193 = vunpack.c.h.b16 %v785
    %v1194 = vunpack.c.l.b16 %v786
    %v1195 = vunpack.c.l.b16 %v787
    %v1196 = vunpack.c.h.b16 %v787
    %v1197 = vunpack.c.l.b16 %v788
    %v1198 = vunpack.c.h.b16 %v788
    %v1199 = vunpack.c.l.b16 %v789
    %v1200 = vunpack.c.l.b16 %v790
    %v1201 = vunpack.c.h.b16 %v790
    %v1202 = vunpack.c.l.b16 %v791
    %v1203 = vunpack.c.h.b16 %v791
    %v1204 = vunpack.c.l.b16 %v792
    %v1205 = vunpack.c.l.b16 %v793
    %v1206 = vunpack.c.h.b16 %v793
    %v1207 = vunpack.c.l.b16 %v794
    %v1208 = vunpack.c.h.b16 %v794
    %v1209 = vunpack.c.l.b16 %v795
    %v1210 = vunpack.c.l.b16 %v796
    %v1211 = vunpack.c.h.b16 %v796
    %v1212 = vunpack.c.l.b16 %v797
    %v1213 = vunpack.c.h.b16 %v797
    %v1214 = vunpack.c.l.b16 %v798
    %v1215 = vunpack.c.l.b16 %v799
    %v1216 = vunpack.c.h.b16 %v799
    %v1217 = vunpack.c.l.b16 %v800
    %v1218 = vunpack.c.h.b16 %v800
    %v1219 = vunpack.c.l.b16 %v801
    %v1220 = vunpack.c.l.b16 %v802
    %v1221 = vunpack.c.h.b16 %v802
    %v1222 = vunpack.c.l.b16 %v803
    %v1223 = vunpack.c.h.b16 %v803
    %v1224 = vunpack.c.l.b16 %v804
    %v1225 = vunpack.c.l.b16 %v805
    %v1226 = vunpack.c.h.b16 %v805
    %v1227 = vunpack.c.l.b16 %v806
    %v1228 = vunpack.c.h.b16 %v806
    %v1229 = vunpack.c.l.b16 %v807
    %v1230 = vunpack.c.l.b16 %v808
    %v1231 = vunpack.c.h.b16 %v808
    %v1232 = vunpack.c.l.b16 %v809
    %v1233 = vunpack.c.h.b16 %v809
    %v1234 = vunpack.c.l.b16 %v810
    %v1235 = vunpack.c.l.b16 %v811
    %v1236 = vunpack.c.h.b16 %v811
    %v1237 = vunpack.c.l.b16 %v812
    %v1238 = vunpack.c.h.b16 %v812
    %v1239 = vunpack.c.l.b16 %v813
    %v1240 = vunpack.c.l.b16 %v814
    %v1241 = vunpack.c.h.b16 %v814
    %v1242 = vunpack.c.l.b16 %v815
    %v1243 = vunpack.c.h.b16 %v815
    %v1244 = vunpack.c.l.b16 %v816
    %v1245 = vunpack.c.l.b16 %v817
    %v1246 = vunpack.c.h.b16 %v817
    %v1247 = vunpack.c.l.b16 %v818
    %v1248 = vunpack.c.h.b16 %v818
    %v1249 = vunpack.c.l.b16 %v819
    %v1250 = vunpack.c.l.b16 %v820
    %v1251 = vunpack.c.h.b16 %v820
    %v1252 = vunpack.c.l.b16 %v821
    %v1253 = vunpack.c.h.b16 %v821
    %v1254 = vunpack.c.l.b16 %v822
    %v1255 = vunpack.c.l.b16 %v823
    %v1256 = vunpack.c.h.b16 %v823
    %v1257 = vunpack.c.l.b16 %v824
    %v1258 = vunpack.c.h.b16 %v824
    %v1259 = vunpack.c.l.b16 %v825
    %v1260 = vunpack.c.l.b16 %v826
    %v1261 = vunpack.c.h.b16 %v826
    %v1262 = vunpack.c.l.b16 %v827
    %v1263 = vunpack.c.h.b16 %v827
    %v1264 = vunpack.c.l.b16 %v828
    %v1265 = vunpack.c.l.b16 %v829
    %v1266 = vunpack.c.h.b16 %v829
    %v1267 = vunpack.c.l.b16 %v830
    %v1268 = vunpack.c.h.b16 %v830
    %v1269 = vunpack.c.l.b16 %v831
    %v1270 = vunpack.c.l.b16 %v832
    %v1271 = vunpack.c.h.b16 %v832
    %v1272 = vunpack.c.l.b16 %v833
    %v1273 = vunpack.c.h.b16 %v833
    %v1274 = vunpack.c.l.b16 %v834
    %v1275 = vunpack.c.l.b16 %v835
    %v1276 = vunpack.c.h.b16 %v835
    %v1277 = vunpack.c.l.b16 %v836
    %v1278 = vunpack.c.h.b16 %v836
    %v1279 = vunpack.c.l.b16 %v837
    %v1280 = vunpack.c.l.b16 %v838
    %v1281 = vunpack.c.h.b16 %v838
    %v1282 = vunpack.c.l.b16 %v839
    %v1283 = vunpack.c.h.b16 %v839
    %v1284 = vunpack.c.l.b16 %v840
    %v1285 = vunpack.c.l.b16 %v841
    %v1286 = vunpack.c.h.b16 %v841
    %v1287 = vunpack.c.l.b16 %v842
    %v1288 = vunpack.c.h.b16 %v842
    %v1289 = vunpack.c.l.b16 %v843
    %v1290 = vunpack.c.l.b16 %v844
    %v1291 = vunpack.c.h.b16 %v844
    %v1292 = vunpack.c.l.b16 %v845
    %v1293 = vunpack.c.h.b16 %v845
    %v1294 = vunpack.c.l.b16 %v846
    %v1295 = vunpack.c.l.b16 %v847
    %v1296 = vunpack.c.h.b16 %v847
    %v1297 = vunpack.c.l.b16 %v848
    %v1298 = vunpack.c.h.b16 %v848
    %v1299 = vunpack.c.l.b16 %v849
    %v1300 = vunpack.c.l.b16 %v850
    %v1301 = vunpack.c.h.b16 %v850
    %v1302 = vunpack.c.l.b16 %v851
    %v1303 = vunpack.c.h.b16 %v851
    %v1304 = vunpack.c.l.b16 %v852
    %v1305 = vunpack.c.l.b16 %v853
    %v1306 = vunpack.c.h.b16 %v853
    %v1307 = vunpack.c.l.b16 %v854
    %v1308 = vunpack.c.h.b16 %v854
    %v1309 = vunpack.c.l.b16 %v855
    %v1310 = vunpack.c.l.b16 %v856
    %v1311 = vunpack.c.h.b16 %v856
    %v1312 = vunpack.c.l.b16 %v857
    %v1313 = vunpack.c.h.b16 %v857
    %v1314 = vunpack.c.l.b16 %v858
    %v1315 = vunpack.c.l.b16 %v859
    %v1316 = vunpack.c.h.b16 %v859
    %v1317 = vunpack.c.l.b16 %v860
    %v1318 = vunpack.c.h.b16 %v860
    %v1319 = vunpack.c.l.b16 %v861
    %v1320 = vunpack.c.l.b16 %v862
    %v1321 = vunpack.c.h.b16 %v862
    %v1322 = vunpack.c.l.b16 %v863
    %v1323 = vunpack.c.h.b16 %v863
    %v1324 = vunpack.c.l.b16 %v864
    %v1325 = vunpack.c.l.b16 %v865
    %v1326 = vunpack.c.h.b16 %v865
    %v1327 = vunpack.c.l.b16 %v866
    %v1328 = vunpack.c.h.b16 %v866
    %v1329 = vunpack.c.l.b16 %v867
    %v1330 = vunpack.c.l.b16 %v868
    %v1331 = vunpack.c.h.b16 %v868
    %v1332 = vunpack.c.l.b16 %v869
    %v1333 = vunpack.c.h.b16 %v869
    %v1334 = vunpack.c.l.b16 %v870
    %v1335 = vunpack.c.l.b16 %v871
    %v1336 = vunpack.c.h.b16 %v871
    %v1337 = vunpack.c.l.b16 %v872
    %v1338 = vunpack.c.h.b16 %v872
    %v1339 = vunpack.c.l.b16 %v873
    %v1340 = vunpack.c.l.b16 %v874
    %v1341 = vunpack.c.h.b16 %v874
    %v1342 = vunpack.c.l.b16 %v875
    %v1343 = vunpack.c.h.b16 %v875
    %v1344 = vunpack.c.l.b16 %v876
    %v1345 = vunpack.c.l.b16 %v877
    %v1346 = vunpack.c.h.b16 %v877
    %v1347 = vunpack.c.l.b16 %v878
    %v1348 = vunpack.c.h.b16 %v878
    %v1349 = vunpack.c.l.b16 %v879
    %v1350 = vunpack.c.l.b16 %v880
    %v1351 = vunpack.c.h.b16 %v880
    %v1352 = vunpack.c.l.b16 %v881
    %v1353 = vunpack.c.h.b16 %v881
    %v1354 = vunpack.c.l.b16 %v882
    %v1355 = vunpack.c.l.b16 %v883
    %v1356 = vunpack.c.h.b16 %v883
    %v1357 = vunpack.c.l.b16 %v884
    %v1358 = vunpack.c.h.b16 %v884
    %v1359 = vunpack.c.l.b16 %v885
    %v1360 = vunpack.c.l.b16 %v886
    %v1361 = vunpack.c.h.b16 %v886
    %v1362 = vunpack.c.l.b16 %v887
    %v1363 = vunpack.c.h.b16 %v887
    %v1364 = vunpack.c.l.b16 %v888
    %v1365 = vunpack.c.l.b16 %v889
    %v1366 = vunpack.c.h.b16 %v889
    %v1367 = vunpack.c.l.b16 %v890
    %v1368 = vunpack.c.h.b16 %v890
    %v1369 = vunpack.c.l.b16 %v891
    %v1370 = vunpack.c.l.b16 %v892
    %v1371 = vunpack.c.h.b16 %v892
    %v1372 = vunpack.c.l.b16 %v893
    %v1373 = vunpack.c.h.b16 %v893
    %v1374 = vunpack.c.l.b16 %v894
    %v1375 = vunpack.c.l.b16 %v895
    %v1376 = vunpack.c.h.b16 %v895
    %v1377 = vunpack.c.l.b16 %v896
    %v1378 = vunpack.c.h.b16 %v896
    %v1379 = vunpack.c.l.b16 %v897
    %v1380 = vunpack.c.l.b16 %v898
    %v1381 = vunpack.c.h.b16 %v898
    %v1382 = vunpack.c.l.b16 %v899
    %v1383 = vunpack.c.h.b16 %v899
    %v1384 = vunpack.c.l.b16 %v900
    %v1385 = vunpack.c.l.b16 %v901
    %v1386 = vunpack.c.h.b16 %v901
    %v1387 = vunpack.c.l.b16 %v902
    %v1388 = vunpack.c.h.b16 %v902
    %v1389 = vunpack.c.l.b16 %v903
    %v1390 = vunpack.c.l.b16 %v904
    %v1391 = vunpack.c.h.b16 %v904
    %v1392 = vunpack.c.l.b16 %v905
    %v1393 = vunpack.c.h.b16 %v905
    %v1394 = vunpack.c.l.b16 %v906
    %v1395 = vunpack.c.l.b16 %v907
    %v1396 = vunpack.c.h.b16 %v907
    %v1397 = vunpack.c.l.b16 %v908
    %v1398 = vunpack.c.h.b16 %v908
    %v1399 = vunpack.c.l.b16 %v909
    %v1400 = vunpack.c.l.b16 %v910
    %v1401 = vunpack.c.h.b16 %v910
    %v1402 = vunpack.c.l.b16 %v911
    %v1403 = vunpack.c.h.b16 %v911
    %v1404 = vunpack.c.l.b16 %v912
    %v1405 = vunpack.c.l.b16 %v913
    %v1406 = vunpack.c.h.b16 %v913
    %v1407 = vunpack.c.l.b16 %v914
    %v1408 = vunpack.c.h.b16 %v914
    %v1409 = vunpack.c.l.b16 %v915
    %v1410 = vunpack.c.l.b16 %v916
    %v1411 = vunpack.c.h.b16 %v916
    %v1412 = vunpack.c.l.b16 %v917
    %v1413 = vunpack.c.h.b16 %v917
    %v1414 = vunpack.c.l.b16 %v918
    %v1415 = vunpack.c.l.b16 %v919
    %v1416 = vunpack.c.h.b16 %v919
    %v1417 = vunpack.c.l.b16 %v920
    %v1418 = vunpack.c.h.b16 %v920
    %v1419 = vunpack.c.l.b16 %v921
    %v1420 = vunpack.c.l.b16 %v922
    %v1421 = vunpack.c.h.b16 %v922
    %v1422 = vunpack.c.l.b16 %v923
    %v1423 = vunpack.c.h.b16 %v923
    %v1424 = vunpack.c.l.b16 %v924
    %v1425 = vunpack.c.l.b16 %v925
    %v1426 = vunpack.c.h.b16 %v925
    %v1427 = vunpack.c.l.b16 %v926
    %v1428 = vunpack.c.h.b16 %v926
    %v1429 = vunpack.c.l.b16 %v927
    %v1430 = vunpack.c.l.b16 %v928
    %v1431 = vunpack.c.h.b16 %v928
    %v1432 = vunpack.c.l.b16 %v929
    %v1433 = vunpack.c.h.b16 %v929
    %v1434 = vunpack.c.l.b16 %v930
    %v1435 = vunpack.c.l.b16 %v931
    %v1436 = vunpack.c.h.b16 %v931
    %v1437 = vunpack.c.l.b16 %v932
    %v1438 = vunpack.c.h.b16 %v932
    %v1439 = vunpack.c.l.b16 %v933
    %v1440 = vunpack.c.l.b16 %v934
    %v1441 = vunpack.c.h.b16 %v934
    %v1442 = vunpack.c.l.b16 %v935
    %v1443 = vunpack.c.h.b16 %v935
    %v1444 = vunpack.c.l.b16 %v936
    %v1445 = vunpack.c.l.b16 %v937
    %v1446 = vunpack.c.h.b16 %v937
    %v1447 = vunpack.c.l.b16 %v938
    %v1448 = vunpack.c.h.b16 %v938
    %v1449 = vunpack.c.l.b16 %v939
    %v1450 = vunpack.c.l.b16 %v940
    %v1451 = vunpack.c.h.b16 %v940
    %v1452 = vunpack.c.l.b16 %v941
    %v1453 = vunpack.c.h.b16 %v941
    %v1454 = vunpack.c.l.b16 %v942
    %v1455 = vpack.c.b16 %v1140, %v1135
    %v1456 = vpack.c.b16 %v1141, %v1136
    %v1457 = vpack.c.b16 %v1142, %v1137
    %v1458 = vpack.c.b16 %v1143, %v1138
    %v1459 = vpack.c.b16 %v1144, %v1139
    %v1460 = vpack.c.b16 %v1150, %v1145
    %v1461 = vpack.c.b16 %v1151, %v1146
    %v1462 = vpack.c.b16 %v1152, %v1147
    %v1463 = vpack.c.b16 %v1153, %v1148
    %v1464 = vpack.c.b16 %v1154, %v1149
    %v1465 = vpack.c.b16 %v1160, %v1155
    %v1466 = vpack.c.b16 %v1161, %v1156
    %v1467 = vpack.c.b16 %v1162, %v1157
    %v1468 = vpack.c.b16 %v1163, %v1158
    %v1469 = vpack.c.b16 %v1164, %v1159
    %v1470 = vpack.c.b16 %v1170, %v1165
    %v1471 = vpack.c.b16 %v1171, %v1166
    %v1472 = vpack.c.b16 %v1172, %v1167
    %v1473 = vpack.c.b16 %v1173, %v1168
    %v1474 = vpack.c.b16 %v1174, %v1169
    %v1475 = vpack.c.b16 %v1180, %v1175
    %v1476 = vpack.c.b16 %v1181, %v1176
    %v1477 = vpack.c.b16 %v1182, %v1177
    %v1478 = vpack.c.b16 %v1183, %v1178
    %v1479 = vpack.c.b16 %v1184, %v1179
    %v1480 = vpack.c.b16 %v1190, %v1185
    %v1481 = vpack.c.b16 %v1191, %v1186
    %v1482 = vpack.c.b16 %v1192, %v1187
    %v1483 = vpack.c.b16 %v1193, %v1188
    %v1484 = vpack.c.b16 %v1194, %v1189
    %v1485 = vpack.c.b16 %v1200, %v1195
    %v1486 = vpack.c.b16 %v1201, %v1196
    %v1487 = vpack.c.b16 %v1202, %v1197
    %v1488 = vpack.c.b16 %v1203, %v1198
    %v1489 = vpack.c.b16 %v1204, %v1199
    %v1490 = vpack.c.b16 %v1210, %v1205
    %v1491 = vpack.c.b16 %v1211, %v1206
    %v1492 = vpack.c.b16 %v1212, %v1207
    %v1493 = vpack.c.b16 %v1213, %v1208
    %v1494 = vpack.c.b16 %v1214, %v1209
    %v1495 = vpack.c.b16 %v1220, %v1215
    %v1496 = vpack.c.b16 %v1221, %v1216
    %v1497 = vpack.c.b16 %v1222, %v1217
    %v1498 = vpack.c.b16 %v1223, %v1218
    %v1499 = vpack.c.b16 %v1224, %v1219
    %v1500 = vpack.c.b16 %v1230, %v1225
    %v1501 = vpack.c.b16 %v1231, %v1226
    %v1502 = vpack.c.b16 %v1232, %v1227
    %v1503 = vpack.c.b16 %v1233, %v1228
    %v1504 = vpack.c.b16 %v1234, %v1229
    %v1505 = vpack.c.b16 %v1240, %v1235
    %v1506 = vpack.c.b16 %v1241, %v1236
    %v1507 = vpack.c.b16 %v1242, %v1237
    %v1508 = vpack.c.b16 %v1243, %v1238
    %v1509 = vpack.c.b16 %v1244, %v1239
    %v1510 = vpack.c.b16 %v1250, %v1245
    %v1511 = vpack.c.b16 %v1251, %v1246
    %v1512 = vpack.c.b16 %v1252, %v1247
    %v1513 = vpack.c.b16 %v1253, %v1248
    %v1514 = vpack.c.b16 %v1254, %v1249
    %v1515 = vpack.c.b16 %v1260, %v1255
    %v1516 = vpack.c.b16 %v1261, %v1256
    %v1517 = vpack.c.b16 %v1262, %v1257
    %v1518 = vpack.c.b16 %v1263, %v1258
    %v1519 = vpack.c.b16 %v1264, %v1259
    %v1520 = vpack.c.b16 %v1270, %v1265
    %v1521 = vpack.c.b16 %v1271, %v1266
    %v1522 = vpack.c.b16 %v1272, %v1267
    %v1523 = vpack.c.b16 %v1273, %v1268
    %v1524 = vpack.c.b16 %v1274, %v1269
    %v1525 = vpack.c.b16 %v1280, %v1275
    %v1526 = vpack.c.b16 %v1281, %v1276
    %v1527 = vpack.c.b16 %v1282, %v1277
    %v1528 = vpack.c.b16 %v1283, %v1278
    %v1529 = vpack.c.b16 %v1284, %v1279
    %v1530 = vpack.c.b16 %v1290, %v1285
    %v1531 = vpack.c.b16 %v1291, %v1286
    %v1532 = vpack.c.b16 %v1292, %v1287
    %v1533 = vpack.c.b16 %v1293, %v1288
    %v1534 = vpack.c.b16 %v1294, %v1289
    %v1535 = vpack.c.b16 %v1300, %v1295
    %v1536 = vpack.c.b16 %v1301, %v1296
    %v1537 = vpack.c.b16 %v1302, %v1297
    %v1538 = vpack.c.b16 %v1303, %v1298
    %v1539 = vpack.c.b16 %v1304, %v1299
    %v1540 = vpack.c.b16 %v1310, %v1305
    %v1541 = vpack.c.b16 %v1311, %v1306
    %v1542 = vpack.c.b16 %v1312, %v1307
    %v1543 = vpack.c.b16 %v1313, %v1308
    %v1544 = vpack.c.b16 %v1314, %v1309
    %v1545 = vpack.c.b16 %v1320, %v1315
    %v1546 = vpack.c.b16 %v1321, %v1316
    %v1547 = vpack.c.b16 %v1322, %v1317
    %v1548 = vpack.c.b16 %v1323, %v1318
    %v1549 = vpack.c.b16 %v1324, %v1319
    %v1550 = vpack.c.b16 %v1330, %v1325
    %v1551 = vpack.c.b16 %v1331, %v1326
    %v1552 = vpack.c.b16 %v1332, %v1327
    %v1553 = vpack.c.b16 %v1333, %v1328
    %v1554 = vpack.c.b16 %v1334, %v1329
    %v1555 = vpack.c.b16 %v1340, %v1335
    %v1556 = vpack.c.b16 %v1341, %v1336
    %v1557 = vpack.c.b16 %v1342, %v1337
    %v1558 = vpack.c.b16 %v1343, %v1338
    %v1559 = vpack.c.b16 %v1344, %v1339
    %v1560 = vpack.c.b16 %v1350, %v1345
    %v1561 = vpack.c.b16 %v1351, %v1346
    %v1562 = vpack.c.b16 %v1352, %v1347
    %v1563 = vpack.c.b16 %v1353, %v1348
    %v1564 = vpack.c.b16 %v1354, %v1349
    %v1565 = vpack.c.b16 %v1360, %v1355
    %v1566 = vpack.c.b16 %v1361, %v1356
    %v1567 = vpack.c.b16 %v1362, %v1357
    %v1568 = vpack.c.b16 %v1363, %v1358
    %v1569 = vpack.c.b16 %v1364, %v1359
    %v1570 = vpack.c.b16 %v1370, %v1365
    %v1571 = vpack.c.b16 %v1371, %v1366
    %v1572 = vpack.c.b16 %v1372, %v1367
    %v1573 = vpack.c.b16 %v1373, %v1368
    %v1574 = vpack.c.b16 %v1374, %v1369
    %v1575 = vpack.c.b16 %v1380, %v1375
    %v1576 = vpack.c.b16 %v1381, %v1376
    %v1577 = vpack.c.b16 %v1382, %v1377
    %v1578 = vpack.c.b16 %v1383, %v1378
    %v1579 = vpack.c.b16 %v1384, %v1379
    %v1580 = vpack.c.b16 %v1390, %v1385
    %v1581 = vpack.c.b16 %v1391, %v1386
    %v1582 = vpack.c.b16 %v1392, %v1387
    %v1583 = vpack.c.b16 %v1393, %v1388
    %v1584 = vpack.c.b16 %v1394, %v1389
    %v1585 = vpack.c.b16 %v1400, %v1395
    %v1586 = vpack.c.b16 %v1401, %v1396
    %v1587 = vpack.c.b16 %v1402, %v1397
    %v1588 = vpack.c.b16 %v1403, %v1398
    %v1589 = vpack.c.b16 %v1404, %v1399
    %v1590 = vpack.c.b16 %v1410, %v1405
    %v1591 = vpack.c.b16 %v1411, %v1406
    %v1592 = vpack.c.b16 %v1412, %v1407
    %v1593 = vpack.c.b16 %v1413, %v1408
    %v1594 = vpack.c.b16 %v1414, %v1409
    %v1595 = vpack.c.b16 %v1420, %v1415
    %v1596 = vpack.c.b16 %v1421, %v1416
    %v1597 = vpack.c.b16 %v1422, %v1417
    %v1598 = vpack.c.b16 %v1423, %v1418
    %v1599 = vpack.c.b16 %v1424, %v1419
    %v1600 = vpack.c.b16 %v1430, %v1425
    %v1601 = vpack.c.b16 %v1431, %v1426
    %v1602 = vpack.c.b16 %v1432, %v1427
    %v1603 = vpack.c.b16 %v1433, %v1428
    %v1604 = vpack.c.b16 %v1434, %v1429
    %v1605 = vpack.c.b16 %v1440, %v1435
    %v1606 = vpack.c.b16 %v1441, %v1436
    %v1607 = vpack.c.b16 %v1442, %v1437
    %v1608 = vpack.c.b16 %v1443, %v1438
    %v1609 = vpack.c.b16 %v1444, %v1439
    %v1610 = vpack.c.b16 %v1450, %v1445
    %v1611 = vpack.c.b16 %v1451, %v1446
    %v1612 = vpack.c.b16 %v1452, %v1447
    %v1613 = vpack.c.b16 %v1453, %v1448
    %v1614 = vpack.c.b16 %v1454, %v1449
    %1775 = vmatpush.bf16.msra.mxu0 %v1490
    %1776 = vmatpush.bf16.msra.mxu0 %v1485
    %1777 = vmatpush.bf16.msra.mxu0 %v1480
    %1778 = vmatpush.bf16.msra.mxu0 %v1475
    %1779 = vmatpush.bf16.msra.mxu0 %v1470
    %1780 = vmatpush.bf16.msra.mxu0 %v1465
    %1781 = vmatpush.bf16.msra.mxu0 %v1460
    %1782 = vmatpush.bf16.msra.mxu0 %v1455
    %1783 = vmatmul.bf16.gmra.mxu0 %v747
    %v1784 = vpop.f32.mrf.mxu0
    %v1785 = vadd.f32 0.0, %v1784
    %v1786 = vpop.f32.mrf.mxu0
    %v1787 = vadd.f32 0.0, %v1786
    %1788 = vdwg.mxu0
    %1789 = vmatpush.bf16.msra.mxu0 %v1530
    %1790 = vmatpush.bf16.msra.mxu0 %v1525
    %1791 = vmatpush.bf16.msra.mxu0 %v1520
    %1792 = vmatpush.bf16.msra.mxu0 %v1515
    %1793 = vmatpush.bf16.msra.mxu0 %v1510
    %1794 = vmatpush.bf16.msra.mxu0 %v1505
    %1795 = vmatpush.bf16.msra.mxu0 %v1500
    %1796 = vmatpush.bf16.msra.mxu0 %v1495
    %1797 = vmatmul.bf16.gmra.mxu0 %v748
    %v1798 = vpop.f32.mrf.mxu0
    %v1799 = vadd.f32 %v1785, %v1798
    %v1800 = vpop.f32.mrf.mxu0
    %v1801 = vadd.f32 %v1787, %v1800
    %1802 = vdwg.mxu0
    %1803 = vmatpush.bf16.msra.mxu0 %v1570
    %1804 = vmatpush.bf16.msra.mxu0 %v1565
    %1805 = vmatpush.bf16.msra.mxu0 %v1560
    %1806 = vmatpush.bf16.msra.mxu0 %v1555
    %1807 = vmatpush.bf16.msra.mxu0 %v1550
    %1808 = vmatpush.bf16.msra.mxu0 %v1545
    %1809 = vmatpush.bf16.msra.mxu0 %v1540
    %1810 = vmatpush.bf16.msra.mxu0 %v1535
    %1811 = vmatmul.bf16.gmra.mxu0 %v749
    %v1812 = vpop.f32.mrf.mxu0
    %v1813 = vadd.f32 %v1799, %v1812
    %v1814 = vpop.f32.mrf.mxu0
    %v1815 = vadd.f32 %v1801, %v1814
    %1816 = vdwg.mxu0
    %1817 = vmatpush.bf16.msra.mxu0 %v1610
    %1818 = vmatpush.bf16.msra.mxu0 %v1605
    %1819 = vmatpush.bf16.msra.mxu0 %v1600
    %1820 = vmatpush.bf16.msra.mxu0 %v1595
    %1821 = vmatpush.bf16.msra.mxu0 %v1590
    %1822 = vmatpush.bf16.msra.mxu0 %v1585
    %1823 = vmatpush.bf16.msra.mxu0 %v1580
    %1824 = vmatpush.bf16.msra.mxu0 %v1575
    %1825 = vmatmul.bf16.gmra.mxu0 %v750
    %v1826 = vpop.f32.mrf.mxu0
    %v1827 = vadd.f32 %v1813, %v1826
    %v1828 = vpop.f32.mrf.mxu0
    %v1829 = vadd.f32 %v1815, %v1828
    %1830 = vdwg.mxu0
    %1831 = vmatpush.bf16.msra.mxu0 %v1491
    %1832 = vmatpush.bf16.msra.mxu0 %v1486
    %1833 = vmatpush.bf16.msra.mxu0 %v1481
    %1834 = vmatpush.bf16.msra.mxu0 %v1476
    %1835 = vmatpush.bf16.msra.mxu0 %v1471
    %1836 = vmatpush.bf16.msra.mxu0 %v1466
    %1837 = vmatpush.bf16.msra.mxu0 %v1461
    %1838 = vmatpush.bf16.msra.mxu0 %v1456
    %1839 = vmatmul.bf16.gmra.mxu0 %v747
    %v1840 = vpop.f32.mrf.mxu0
    %v1841 = vadd.f32 0.0, %v1840
    %v1842 = vpop.f32.mrf.mxu0
    %v1843 = vadd.f32 0.0, %v1842
    %1844 = vdwg.mxu0
    %1845 = vmatpush.bf16.msra.mxu0 %v1531
    %1846 = vmatpush.bf16.msra.mxu0 %v1526
    %1847 = vmatpush.bf16.msra.mxu0 %v1521
    %1848 = vmatpush.bf16.msra.mxu0 %v1516
    %1849 = vmatpush.bf16.msra.mxu0 %v1511
    %1850 = vmatpush.bf16.msra.mxu0 %v1506
    %1851 = vmatpush.bf16.msra.mxu0 %v1501
    %1852 = vmatpush.bf16.msra.mxu0 %v1496
    %1853 = vmatmul.bf16.gmra.mxu0 %v748
    %v1854 = vpop.f32.mrf.mxu0
    %v1855 = vadd.f32 %v1841, %v1854
    %v1856 = vpop.f32.mrf.mxu0
    %v1857 = vadd.f32 %v1843, %v1856
    %1858 = vdwg.mxu0
    %1859 = vmatpush.bf16.msra.mxu0 %v1571
    %1860 = vmatpush.bf16.msra.mxu0 %v1566
    %1861 = vmatpush.bf16.msra.mxu0 %v1561
    %1862 = vmatpush.bf16.msra.mxu0 %v1556
    %1863 = vmatpush.bf16.msra.mxu0 %v1551
    %1864 = vmatpush.bf16.msra.mxu0 %v1546
    %1865 = vmatpush.bf16.msra.mxu0 %v1541
    %1866 = vmatpush.bf16.msra.mxu0 %v1536
    %1867 = vmatmul.bf16.gmra.mxu0 %v749
    %v1868 = vpop.f32.mrf.mxu0
    %v1869 = vadd.f32 %v1855, %v1868
    %v1870 = vpop.f32.mrf.mxu0
    %v1871 = vadd.f32 %v1857, %v1870
    %1872 = vdwg.mxu0
    %1873 = vmatpush.bf16.msra.mxu0 %v1611
    %1874 = vmatpush.bf16.msra.mxu0 %v1606
    %1875 = vmatpush.bf16.msra.mxu0 %v1601
    %1876 = vmatpush.bf16.msra.mxu0 %v1596
    %1877 = vmatpush.bf16.msra.mxu0 %v1591
    %1878 = vmatpush.bf16.msra.mxu0 %v1586
    %1879 = vmatpush.bf16.msra.mxu0 %v1581
    %1880 = vmatpush.bf16.msra.mxu0 %v1576
    %1881 = vmatmul.bf16.gmra.mxu0 %v750
    %v1882 = vpop.f32.mrf.mxu0
    %v1883 = vadd.f32 %v1869, %v1882
    %v1884 = vpop.f32.mrf.mxu0
    %v1885 = vadd.f32 %v1871, %v1884
    %1886 = vdwg.mxu0
    %1887 = vmatpush.bf16.msra.mxu0 %v1492
    %1888 = vmatpush.bf16.msra.mxu0 %v1487
    %1889 = vmatpush.bf16.msra.mxu0 %v1482
    %1890 = vmatpush.bf16.msra.mxu0 %v1477
    %1891 = vmatpush.bf16.msra.mxu0 %v1472
    %1892 = vmatpush.bf16.msra.mxu0 %v1467
    %1893 = vmatpush.bf16.msra.mxu0 %v1462
    %1894 = vmatpush.bf16.msra.mxu0 %v1457
    %1895 = vmatmul.bf16.gmra.mxu0 %v747
    %v1896 = vpop.f32.mrf.mxu0
    %v1897 = vadd.f32 0.0, %v1896
    %v1898 = vpop.f32.mrf.mxu0
    %v1899 = vadd.f32 0.0, %v1898
    %1900 = vdwg.mxu0
    %1901 = vmatpush.bf16.msra.mxu0 %v1532
    %1902 = vmatpush.bf16.msra.mxu0 %v1527
    %1903 = vmatpush.bf16.msra.mxu0 %v1522
    %1904 = vmatpush.bf16.msra.mxu0 %v1517
    %1905 = vmatpush.bf16.msra.mxu0 %v1512
    %1906 = vmatpush.bf16.msra.mxu0 %v1507
    %1907 = vmatpush.bf16.msra.mxu0 %v1502
    %1908 = vmatpush.bf16.msra.mxu0 %v1497
    %1909 = vmatmul.bf16.gmra.mxu0 %v748
    %v1910 = vpop.f32.mrf.mxu0
    %v1911 = vadd.f32 %v1897, %v1910
    %v1912 = vpop.f32.mrf.mxu0
    %v1913 = vadd.f32 %v1899, %v1912
    %1914 = vdwg.mxu0
    %1915 = vmatpush.bf16.msra.mxu0 %v1572
    %1916 = vmatpush.bf16.msra.mxu0 %v1567
    %1917 = vmatpush.bf16.msra.mxu0 %v1562
    %1918 = vmatpush.bf16.msra.mxu0 %v1557
    %1919 = vmatpush.bf16.msra.mxu0 %v1552
    %1920 = vmatpush.bf16.msra.mxu0 %v1547
    %1921 = vmatpush.bf16.msra.mxu0 %v1542
    %1922 = vmatpush.bf16.msra.mxu0 %v1537
    %1923 = vmatmul.bf16.gmra.mxu0 %v749
    %v1924 = vpop.f32.mrf.mxu0
    %v1925 = vadd.f32 %v1911, %v1924
    %v1926 = vpop.f32.mrf.mxu0
    %v1927 = vadd.f32 %v1913, %v1926
    %1928 = vdwg.mxu0
    %1929 = vmatpush.bf16.msra.mxu0 %v1612
    %1930 = vmatpush.bf16.msra.mxu0 %v1607
    %1931 = vmatpush.bf16.msra.mxu0 %v1602
    %1932 = vmatpush.bf16.msra.mxu0 %v1597
    %1933 = vmatpush.bf16.msra.mxu0 %v1592
    %1934 = vmatpush.bf16.msra.mxu0 %v1587
    %1935 = vmatpush.bf16.msra.mxu0 %v1582
    %1936 = vmatpush.bf16.msra.mxu0 %v1577
    %1937 = vmatmul.bf16.gmra.mxu0 %v750
    %v1938 = vpop.f32.mrf.mxu0
    %v1939 = vadd.f32 %v1925, %v1938
    %v1940 = vpop.f32.mrf.mxu0
    %v1941 = vadd.f32 %v1927, %v1940
    %1942 = vdwg.mxu0
    %1943 = vmatpush.bf16.msra.mxu0 %v1493
    %1944 = vmatpush.bf16.msra.mxu0 %v1488
    %1945 = vmatpush.bf16.msra.mxu0 %v1483
    %1946 = vmatpush.bf16.msra.mxu0 %v1478
    %1947 = vmatpush.bf16.msra.mxu0 %v1473
    %1948 = vmatpush.bf16.msra.mxu0 %v1468
    %1949 = vmatpush.bf16.msra.mxu0 %v1463
    %1950 = vmatpush.bf16.msra.mxu0 %v1458
    %1951 = vmatmul.bf16.gmra.mxu0 %v747
    %v1952 = vpop.f32.mrf.mxu0
    %v1953 = vadd.f32 0.0, %v1952
    %v1954 = vpop.f32.mrf.mxu0
    %v1955 = vadd.f32 0.0, %v1954
    %1956 = vdwg.mxu0
    %1957 = vmatpush.bf16.msra.mxu0 %v1533
    %1958 = vmatpush.bf16.msra.mxu0 %v1528
    %1959 = vmatpush.bf16.msra.mxu0 %v1523
    %1960 = vmatpush.bf16.msra.mxu0 %v1518
    %1961 = vmatpush.bf16.msra.mxu0 %v1513
    %1962 = vmatpush.bf16.msra.mxu0 %v1508
    %1963 = vmatpush.bf16.msra.mxu0 %v1503
    %1964 = vmatpush.bf16.msra.mxu0 %v1498
    %1965 = vmatmul.bf16.gmra.mxu0 %v748
    %v1966 = vpop.f32.mrf.mxu0
    %v1967 = vadd.f32 %v1953, %v1966
    %v1968 = vpop.f32.mrf.mxu0
    %v1969 = vadd.f32 %v1955, %v1968
    %1970 = vdwg.mxu0
    %1971 = vmatpush.bf16.msra.mxu0 %v1573
    %1972 = vmatpush.bf16.msra.mxu0 %v1568
    %1973 = vmatpush.bf16.msra.mxu0 %v1563
    %1974 = vmatpush.bf16.msra.mxu0 %v1558
    %1975 = vmatpush.bf16.msra.mxu0 %v1553
    %1976 = vmatpush.bf16.msra.mxu0 %v1548
    %1977 = vmatpush.bf16.msra.mxu0 %v1543
    %1978 = vmatpush.bf16.msra.mxu0 %v1538
    %1979 = vmatmul.bf16.gmra.mxu0 %v749
    %v1980 = vpop.f32.mrf.mxu0
    %v1981 = vadd.f32 %v1967, %v1980
    %v1982 = vpop.f32.mrf.mxu0
    %v1983 = vadd.f32 %v1969, %v1982
    %1984 = vdwg.mxu0
    %1985 = vmatpush.bf16.msra.mxu0 %v1613
    %1986 = vmatpush.bf16.msra.mxu0 %v1608
    %1987 = vmatpush.bf16.msra.mxu0 %v1603
    %1988 = vmatpush.bf16.msra.mxu0 %v1598
    %1989 = vmatpush.bf16.msra.mxu0 %v1593
    %1990 = vmatpush.bf16.msra.mxu0 %v1588
    %1991 = vmatpush.bf16.msra.mxu0 %v1583
    %1992 = vmatpush.bf16.msra.mxu0 %v1578
    %1993 = vmatmul.bf16.gmra.mxu0 %v750
    %v1994 = vpop.f32.mrf.mxu0
    %v1995 = vadd.f32 %v1981, %v1994
    %v1996 = vpop.f32.mrf.mxu0
    %v1997 = vadd.f32 %v1983, %v1996
    %1998 = vdwg.mxu0
    %1999 = vmatpush.bf16.msra.mxu0 %v1494
    %2000 = vmatpush.bf16.msra.mxu0 %v1489
    %2001 = vmatpush.bf16.msra.mxu0 %v1484
    %2002 = vmatpush.bf16.msra.mxu0 %v1479
    %2003 = vmatpush.bf16.msra.mxu0 %v1474
    %2004 = vmatpush.bf16.msra.mxu0 %v1469
    %2005 = vmatpush.bf16.msra.mxu0 %v1464
    %2006 = vmatpush.bf16.msra.mxu0 %v1459
    %2007 = vmatmul.bf16.gmra.mxu0 %v747
    %v2008 = vpop.f32.mrf.mxu0
    %v2009 = vadd.f32 0.0, %v2008
    %v2010 = vpop.f32.mrf.mxu0
    %v2011 = vadd.f32 0.0, %v2010
    %2012 = vdwg.mxu0
    %2013 = vmatpush.bf16.msra.mxu0 %v1534
    %2014 = vmatpush.bf16.msra.mxu0 %v1529
    %2015 = vmatpush.bf16.msra.mxu0 %v1524
    %2016 = vmatpush.bf16.msra.mxu0 %v1519
    %2017 = vmatpush.bf16.msra.mxu0 %v1514
    %2018 = vmatpush.bf16.msra.mxu0 %v1509
    %2019 = vmatpush.bf16.msra.mxu0 %v1504
    %2020 = vmatpush.bf16.msra.mxu0 %v1499
    %2021 = vmatmul.bf16.gmra.mxu0 %v748
    %v2022 = vpop.f32.mrf.mxu0
    %v2023 = vadd.f32 %v2009, %v2022
    %v2024 = vpop.f32.mrf.mxu0
    %v2025 = vadd.f32 %v2011, %v2024
    %2026 = vdwg.mxu0
    %2027 = vmatpush.bf16.msra.mxu0 %v1574
    %2028 = vmatpush.bf16.msra.mxu0 %v1569
    %2029 = vmatpush.bf16.msra.mxu0 %v1564
    %2030 = vmatpush.bf16.msra.mxu0 %v1559
    %2031 = vmatpush.bf16.msra.mxu0 %v1554
    %2032 = vmatpush.bf16.msra.mxu0 %v1549
    %2033 = vmatpush.bf16.msra.mxu0 %v1544
    %2034 = vmatpush.bf16.msra.mxu0 %v1539
    %2035 = vmatmul.bf16.gmra.mxu0 %v749
    %v2036 = vpop.f32.mrf.mxu0
    %v2037 = vadd.f32 %v2023, %v2036
    %v2038 = vpop.f32.mrf.mxu0
    %v2039 = vadd.f32 %v2025, %v2038
    %2040 = vdwg.mxu0
    %2041 = vmatpush.bf16.msra.mxu0 %v1614
    %2042 = vmatpush.bf16.msra.mxu0 %v1609
    %2043 = vmatpush.bf16.msra.mxu0 %v1604
    %2044 = vmatpush.bf16.msra.mxu0 %v1599
    %2045 = vmatpush.bf16.msra.mxu0 %v1594
    %2046 = vmatpush.bf16.msra.mxu0 %v1589
    %2047 = vmatpush.bf16.msra.mxu0 %v1584
    %2048 = vmatpush.bf16.msra.mxu0 %v1579
    %2049 = vmatmul.bf16.gmra.mxu0 %v750
    %v2050 = vpop.f32.mrf.mxu0
    %v2051 = vadd.f32 %v2037, %v2050
    %v2052 = vpop.f32.mrf.mxu0
    %v2053 = vadd.f32 %v2039, %v2052
    %2054 = vdwg.mxu0
    %2055 = vxpose.xlu0.b32.start [1/16] %v2051, 128
    %2056 = vxpose.xlu0.b32.cont [2/16] %v2053, 128
    %2057 = vxpose.xlu0.b32.cont [3/16] 0.0, 128
    %2058 = vxpose.xlu0.b32.cont [4/16] 0.0, 128
    %2059 = vxpose.xlu0.b32.cont [5/16] 0.0, 128
    %2060 = vxpose.xlu0.b32.cont [6/16] 0.0, 128
    %2061 = vxpose.xlu0.b32.cont [7/16] 0.0, 128
    %2062 = vxpose.xlu0.b32.cont [8/16] 0.0, 128
    %2063 = vxpose.xlu0.b32.cont [9/16] 0.0, 128
    %2064 = vxpose.xlu0.b32.cont [10/16] 0.0, 128
    %2065 = vxpose.xlu0.b32.cont [11/16] 0.0, 128
    %2066 = vxpose.xlu0.b32.cont [12/16] 0.0, 128
    %2067 = vxpose.xlu0.b32.cont [13/16] 0.0, 128
    %2068 = vxpose.xlu0.b32.cont [14/16] 0.0, 128
    %2069 = vxpose.xlu0.b32.cont [15/16] 0.0, 128
    %2070 = vxpose.xlu0.b32.end [16/16] 0.0, 128
    %v2071 = vpop.trf.xlu0
    %v2072 = vpop.trf.xlu0
    %v2073 = vpop.trf.xlu0
    %v2074 = vpop.trf.xlu0
    %v2075 = vpop.trf.xlu0
    %v2076 = vpop.trf.xlu0
    %v2077 = vpop.trf.xlu0
    %v2078 = vpop.trf.xlu0
    %v2079 = vpop.trf.xlu0
    %v2080 = vpop.trf.xlu0
    %v2081 = vpop.trf.xlu0
    %v2082 = vpop.trf.xlu0
    %v2083 = vpop.trf.xlu0
    %v2084 = vpop.trf.xlu0
    %v2085 = vpop.trf.xlu0
    %v2086 = vpop.trf.xlu0
    %2088 = vset.pattern.permute.xlu0 1
    %2089 = vperm.xlu0 %2088, %v2051
    %v2090 = vpop.permute.xlu0 %2089
    %2093 = vset.pattern.permute.xlu0 1
    %2094 = vperm.xlu0 %2093, %v2053
    %v2095 = vpop.permute.xlu0 %2094
    %v2097 = vperm.slane %v2071, 0
    %v2098 = vadd.f32 %v2090, %v2097
    %v2099 = vadd.f32 %v2095, %v2097
    %2100 = vrot.lane.b32.xlu0 %v2051, 126
    %v2101 = vpop.permute.xlu0 %2100
    %2102 = vrot.lane.b32.xlu0 %v2053, 126
    %v2103 = vpop.permute.xlu0 %2102
    %2106 = vxpose.xlu0.b32.start [1/16] %v2101, 128
    %2107 = vxpose.xlu0.b32.cont [2/16] %v2103, 128
    %2108 = vxpose.xlu0.b32.cont [3/16] 0.0, 128
    %2109 = vxpose.xlu0.b32.cont [4/16] 0.0, 128
    %2110 = vxpose.xlu0.b32.cont [5/16] 0.0, 128
    %2111 = vxpose.xlu0.b32.cont [6/16] 0.0, 128
    %2112 = vxpose.xlu0.b32.cont [7/16] 0.0, 128
    %2113 = vxpose.xlu0.b32.cont [8/16] 0.0, 128
    %2114 = vxpose.xlu0.b32.cont [9/16] 0.0, 128
    %2115 = vxpose.xlu0.b32.cont [10/16] 0.0, 128
    %2116 = vxpose.xlu0.b32.cont [11/16] 0.0, 128
    %2117 = vxpose.xlu0.b32.cont [12/16] 0.0, 128
    %2118 = vxpose.xlu0.b32.cont [13/16] 0.0, 128
    %2119 = vxpose.xlu0.b32.cont [14/16] 0.0, 128
    %2120 = vxpose.xlu0.b32.cont [15/16] 0.0, 128
    %2121 = vxpose.xlu0.b32.end [16/16] 0.0, 128
    %v2122 = vpop.trf.xlu0
    %v2123 = vpop.trf.xlu0
    %v2124 = vpop.trf.xlu0
    %v2125 = vpop.trf.xlu0
    %v2126 = vpop.trf.xlu0
    %v2127 = vpop.trf.xlu0
    %v2128 = vpop.trf.xlu0
    %v2129 = vpop.trf.xlu0
    %v2130 = vpop.trf.xlu0
    %v2131 = vpop.trf.xlu0
    %v2132 = vpop.trf.xlu0
    %v2133 = vpop.trf.xlu0
    %v2134 = vpop.trf.xlu0
    %v2135 = vpop.trf.xlu0
    %v2136 = vpop.trf.xlu0
    %v2137 = vpop.trf.xlu0
    %2138 = vset.pattern.permute.xlu0 3
    %2139 = vperm.xlu0 %2138, %v2051
    %v2140 = vpop.permute.xlu0 %2139
    %2142 = vset.pattern.permute.xlu0 3
    %2143 = vperm.xlu0 %2142, %v2053
    %v2144 = vpop.permute.xlu0 %2143
    %v2146 = vperm.slane %v2122, 0
    %v2147 = vadd.f32 %v2140, %v2146
    %v2148 = vadd.f32 %v2144, %v2146
    %v2149 = vmul.f32 %v2098, 0.2
    %v2150 = vmul.f32 %v2099, 0.2
    %v2151 = vmul.f32 %v2147, 0.2
    %v2152 = vmul.f32 %v2148, 0.2
    %v2153 = vmax.f32 %v2098, %v2149
    %v2154 = vmax.f32 %v2099, %v2150
    %v2155 = vmax.f32 %v2147, %v2151
    %v2156 = vmax.f32 %v2148, %v2152
    %v2157 = vadd.f32 %v2153, %v122
    %v2158 = vadd.f32 %v2154, %v123
    %v2159 = vadd.f32 %v2155, %v122
    %v2160 = vadd.f32 %v2156, %v123
    %v2161 = vsel %vm564, %v2157, -inf
    %2162 = vmax.xlane.f32.xlu0 %v2161
    %v2163 = vpop.xlane.xlu0 %2162
    %v2164 = vsel %vm564, %v2158, -inf
    %2165 = vmax.xlane.f32.xlu0 %v2164
    %v2166 = vpop.xlane.xlu0 %2165
    %v2167 = vsel %vm564, %v2159, -inf
    %2168 = vmax.xlane.f32.xlu0 %v2167
    %v2169 = vpop.xlane.xlu0 %2168
    %v2170 = vsel %vm564, %v2160, -inf
    %2171 = vmax.xlane.f32.xlu0 %v2170
    %v2172 = vpop.xlane.xlu0 %2171
    %v2173 = vsub.f32 %v2157, %v2163
    %v2174 = vsub.f32 %v2158, %v2166
    %v2175 = vsub.f32 %v2159, %v2169
    %v2176 = vsub.f32 %v2160, %v2172
    %v2177 = vmul.f32 %v2173, 1.442695
    %v2178 = vpow.pop %v2177
    %v2179 = vmul.f32 %v2174, 1.442695
    %v2180 = vpow.pop %v2179
    %v2181 = vmul.f32 %v2175, 1.442695
    %v2182 = vpow.pop %v2181
    %v2183 = vmul.f32 %v2176, 1.442695
    %v2184 = vpow.pop %v2183
    %v2185 = vsel %vm564, %v2178, 0.0
    %2186 = vadd.xlane.f32.xlu0 %v2185
    %v2187 = vpop.xlane.xlu0 %2186
    %v2188 = vsel %vm564, %v2180, 0.0
    %2189 = vadd.xlane.f32.xlu0 %v2188
    %v2190 = vpop.xlane.xlu0 %2189
    %v2191 = vsel %vm564, %v2182, 0.0
    %2192 = vadd.xlane.f32.xlu0 %v2191
    %v2193 = vpop.xlane.xlu0 %2192
    %v2194 = vsel %vm564, %v2184, 0.0
    %2195 = vadd.xlane.f32.xlu0 %v2194
    %v2196 = vpop.xlane.xlu0 %2195
    %v2197 = vrcp.pop %v2187
    %v2198 = vrcp.pop %v2190
    %v2199 = vrcp.pop %v2193
    %v2200 = vrcp.pop %v2196
    %v2201 = vmul.f32 %v2178, %v2197
    %v2202 = vmul.f32 %v2180, %v2198
    %v2203 = vmul.f32 %v2182, %v2199
    %v2204 = vmul.f32 %v2184, %v2200
    %v2205 = vpack.c.bf16 %v2201, %v2201
    %v2206 = vpack.c.bf16 %v2202, %v2202
    %v2207 = vpack.c.bf16 %v2203, %v2203
    %v2208 = vpack.c.bf16 %v2204, %v2204
    %v2209 = vpack.c.bf16 %v1829, %v1827
    %v2210 = vpack.c.bf16 %v1885, %v1883
    %v2213 = vunpack.c.l.b16 %v2205
    %v2214 = vunpack.c.l.b16 %v2206
    %v2215 = vpack.c.b16 %v2214, %v2213
    %v2217 = vsel %vm564, %v2215, 0
    %2219 = vmatpush.bf16.msra.mxu0 0
    %2220 = vmatpush.bf16.msra.mxu0 0
    %2221 = vmatpush.bf16.msra.mxu0 0
    %2222 = vmatpush.bf16.msra.mxu0 0
    %2223 = vmatpush.bf16.msra.mxu0 0
    %2224 = vmatpush.bf16.msra.mxu0 0
    %2225 = vmatpush.bf16.msra.mxu0 0
    %2226 = vmatpush.bf16.msra.mxu0 %v2209
    %2227 = vmatmul.bf16.gmra.mxu0 %v2217
    %v2228 = vpop.f32.mrf.mxu0
    %v2229 = vadd.f32 0.0, %v2228
    %v2230 = vpop.f32.mrf.mxu0
    %v2231 = vadd.f32 0.0, %v2230
    %2232 = vdwg.mxu0
    %2233 = vmatpush.bf16.msra.mxu0 0
    %2234 = vmatpush.bf16.msra.mxu0 0
    %2235 = vmatpush.bf16.msra.mxu0 0
    %2236 = vmatpush.bf16.msra.mxu0 0
    %2237 = vmatpush.bf16.msra.mxu0 0
    %2238 = vmatpush.bf16.msra.mxu0 0
    %2239 = vmatpush.bf16.msra.mxu0 0
    %2240 = vmatpush.bf16.msra.mxu0 %v2210
    %2241 = vmatmul.bf16.gmra.mxu0 %v2217
    %v2242 = vpop.f32.mrf.mxu0
    %v2243 = vadd.f32 0.0, %v2242
    %v2244 = vpop.f32.mrf.mxu0
    %v2245 = vadd.f32 0.0, %v2244
    %2246 = vdwg.mxu0
    %v2247 = vpack.c.bf16 %v1941, %v1939
    %v2248 = vpack.c.bf16 %v1997, %v1995
    %v2251 = vunpack.c.l.b16 %v2207
    %v2252 = vunpack.c.l.b16 %v2208
    %v2253 = vpack.c.b16 %v2252, %v2251
    %v2255 = vsel %vm564, %v2253, 0
    %2257 = vmatpush.bf16.msra.mxu0 0
    %2258 = vmatpush.bf16.msra.mxu0 0
    %2259 = vmatpush.bf16.msra.mxu0 0
    %2260 = vmatpush.bf16.msra.mxu0 0
    %2261 = vmatpush.bf16.msra.mxu0 0
    %2262 = vmatpush.bf16.msra.mxu0 0
    %2263 = vmatpush.bf16.msra.mxu0 0
    %2264 = vmatpush.bf16.msra.mxu0 %v2247
    %2265 = vmatmul.bf16.gmra.mxu0 %v2255
    %v2266 = vpop.f32.mrf.mxu0
    %v2267 = vadd.f32 0.0, %v2266
    %v2268 = vpop.f32.mrf.mxu0
    %v2269 = vadd.f32 0.0, %v2268
    %2270 = vdwg.mxu0
    %2271 = vmatpush.bf16.msra.mxu0 0
    %2272 = vmatpush.bf16.msra.mxu0 0
    %2273 = vmatpush.bf16.msra.mxu0 0
    %2274 = vmatpush.bf16.msra.mxu0 0
    %2275 = vmatpush.bf16.msra.mxu0 0
    %2276 = vmatpush.bf16.msra.mxu0 0
    %2277 = vmatpush.bf16.msra.mxu0 0
    %2278 = vmatpush.bf16.msra.mxu0 %v2248
    %2279 = vmatmul.bf16.gmra.mxu0 %v2255
    %v2280 = vpop.f32.mrf.mxu0
    %v2281 = vadd.f32 0.0, %v2280
    %v2282 = vpop.f32.mrf.mxu0
    %v2283 = vadd.f32 0.0, %v2282
    %2284 = vdwg.mxu0
    %v2285 = vld [vmem:[%s5] sm:$0xf]
    %v2287 = vperm.slane %v2285, 0
    %v2288 = vperm.slane %v2285, 1
    %v2289 = vperm.slane %v2285, 2
    %v2290 = vperm.slane %v2285, 3
    %v2295 = vadd.f32 %v2229, %v2287
    %v2296 = vadd.f32 %v2243, %v2288
    %v2297 = vadd.f32 %v2267, %v2289
    %v2298 = vadd.f32 %v2281, %v2290
    %v2299 = vadd.f32 %v2231, %v2287
    %v2300 = vadd.f32 %v2245, %v2288
    %v2301 = vadd.f32 %v2269, %v2289
    %v2302 = vadd.f32 %v2283, %v2290
    %vm2303 = vcmp.gt.f32.partialorder %v2295, 0.0
    %vm2304 = vcmp.gt.f32.partialorder %v2296, 0.0
    %vm2305 = vcmp.gt.f32.partialorder %v2297, 0.0
    %vm2306 = vcmp.gt.f32.partialorder %v2298, 0.0
    %vm2307 = vcmp.gt.f32.partialorder %v2299, 0.0
    %vm2308 = vcmp.gt.f32.partialorder %v2300, 0.0
    %vm2309 = vcmp.gt.f32.partialorder %v2301, 0.0
    %vm2310 = vcmp.gt.f32.partialorder %v2302, 0.0
    %v2311 = vmul.f32 %v2295, 1.442695
    %v2312 = vpow.pop %v2311
    %v2313 = vmul.f32 %v2296, 1.442695
    %v2314 = vpow.pop %v2313
    %v2315 = vmul.f32 %v2297, 1.442695
    %v2316 = vpow.pop %v2315
    %v2317 = vmul.f32 %v2298, 1.442695
    %v2318 = vpow.pop %v2317
    %v2319 = vmul.f32 %v2299, 1.442695
    %v2320 = vpow.pop %v2319
    %v2321 = vmul.f32 %v2300, 1.442695
    %v2322 = vpow.pop %v2321
    %v2323 = vmul.f32 %v2301, 1.442695
    %v2324 = vpow.pop %v2323
    %v2325 = vmul.f32 %v2302, 1.442695
    %v2326 = vpow.pop %v2325
    %v2327 = vsub.f32 %v2312, 1.0
    %v2328 = vsub.f32 %v2314, 1.0
    %v2329 = vsub.f32 %v2316, 1.0
    %v2330 = vsub.f32 %v2318, 1.0
    %v2331 = vsub.f32 %v2320, 1.0
    %v2332 = vsub.f32 %v2322, 1.0
    %v2333 = vsub.f32 %v2324, 1.0
    %v2334 = vsub.f32 %v2326, 1.0
    %v2335 = vsel %vm2303, %v2295, %v2327
    %v2336 = vsel %vm2304, %v2296, %v2328
    %v2337 = vsel %vm2305, %v2297, %v2329
    %v2338 = vsel %vm2306, %v2298, %v2330
    %v2339 = vsel %vm2307, %v2299, %v2331
    %v2340 = vsel %vm2308, %v2300, %v2332
    %v2341 = vsel %vm2309, %v2301, %v2333
    %v2342 = vsel %vm2310, %v2302, %v2334
    %v2343 = vpack.c.bf16 %v2339, %v2335
    %v2344 = vpack.c.bf16 %v2340, %v2336
    %v2345 = vpack.c.bf16 %v2341, %v2337
    %v2346 = vpack.c.bf16 %v2342, %v2338
    %v2347 = vld [vmem:[#allocation10] sm:$0xff]
    %v2348 = vld [vmem:[#allocation10 + $0x8] sm:$0xff]
    %v2349 = vld [vmem:[#allocation10 + $0x10] sm:$0xff]
    %v2350 = vld [vmem:[#allocation10 + $0x18] sm:$0xff]
    %v2351 = vld [vmem:[#allocation10 + $0x20] sm:$0xff]
    %v2352 = vld [vmem:[#allocation10 + $0x28] sm:$0xff]
    %v2353 = vld [vmem:[#allocation10 + $0x30] sm:$0xff]
    %v2354 = vld [vmem:[#allocation10 + $0x38] sm:$0xff]
    %v2355 = vld [vmem:[#allocation10 + $0x40] sm:$0xff]
    %v2356 = vld [vmem:[#allocation10 + $0x48] sm:$0xff]
    %v2357 = vld [vmem:[#allocation10 + $0x50] sm:$0xff]
    %v2358 = vld [vmem:[#allocation10 + $0x58] sm:$0xff]
    %v2359 = vld [vmem:[#allocation10 + $0x60] sm:$0xff]
    %v2360 = vld [vmem:[#allocation10 + $0x68] sm:$0xff]
    %v2361 = vld [vmem:[#allocation10 + $0x70] sm:$0xff]
    %v2362 = vld [vmem:[#allocation10 + $0x78] sm:$0xff]
    %v2363 = vld [vmem:[#allocation10 + $0x80] sm:$0xff]
    %v2364 = vld [vmem:[#allocation10 + $0x88] sm:$0xff]
    %v2365 = vld [vmem:[#allocation10 + $0x90] sm:$0xff]
    %v2366 = vld [vmem:[#allocation10 + $0x98] sm:$0xff]
    %v2367 = vld [vmem:[#allocation10 + $0xa0] sm:$0xff]
    %v2368 = vld [vmem:[#allocation10 + $0xa8] sm:$0xff]
    %v2369 = vld [vmem:[#allocation10 + $0xb0] sm:$0xff]
    %v2370 = vld [vmem:[#allocation10 + $0xb8] sm:$0xff]
    %v2371 = vld [vmem:[#allocation10 + $0xc0] sm:$0xff]
    %v2372 = vld [vmem:[#allocation10 + $0xc8] sm:$0xff]
    %v2373 = vld [vmem:[#allocation10 + $0xd0] sm:$0xff]
    %v2374 = vld [vmem:[#allocation10 + $0xd8] sm:$0xff]
    %v2375 = vld [vmem:[#allocation10 + $0xe0] sm:$0xff]
    %v2376 = vld [vmem:[#allocation10 + $0xe8] sm:$0xff]
    %v2377 = vld [vmem:[#allocation10 + $0xf0] sm:$0xff]
    %v2378 = vld [vmem:[#allocation10 + $0xf8] sm:$0xff]
    %v2379 = vld [vmem:[#allocation10 + $0x100] sm:$0xff]
    %v2380 = vld [vmem:[#allocation10 + $0x108] sm:$0xff]
    %v2381 = vld [vmem:[#allocation10 + $0x110] sm:$0xff]
    %v2382 = vld [vmem:[#allocation10 + $0x118] sm:$0xff]
    %v2383 = vld [vmem:[#allocation10 + $0x120] sm:$0xff]
    %v2384 = vld [vmem:[#allocation10 + $0x128] sm:$0xff]
    %v2385 = vld [vmem:[#allocation10 + $0x130] sm:$0xff]
    %v2386 = vld [vmem:[#allocation10 + $0x138] sm:$0xff]
    %v2387 = vld [vmem:[#allocation10 + $0x140] sm:$0xff]
    %v2388 = vld [vmem:[#allocation10 + $0x148] sm:$0xff]
    %v2389 = vld [vmem:[#allocation10 + $0x150] sm:$0xff]
    %v2390 = vld [vmem:[#allocation10 + $0x158] sm:$0xff]
    %v2391 = vld [vmem:[#allocation10 + $0x160] sm:$0xff]
    %v2392 = vld [vmem:[#allocation10 + $0x168] sm:$0xff]
    %v2393 = vld [vmem:[#allocation10 + $0x170] sm:$0xff]
    %v2394 = vld [vmem:[#allocation10 + $0x178] sm:$0xff]
    %v2395 = vld [vmem:[#allocation10 + $0x180] sm:$0xff]
    %v2396 = vld [vmem:[#allocation10 + $0x188] sm:$0xff]
    %v2397 = vld [vmem:[#allocation10 + $0x190] sm:$0xff]
    %v2398 = vld [vmem:[#allocation10 + $0x198] sm:$0xff]
    %v2399 = vld [vmem:[#allocation10 + $0x1a0] sm:$0xff]
    %v2400 = vld [vmem:[#allocation10 + $0x1a8] sm:$0xff]
    %v2401 = vld [vmem:[#allocation10 + $0x1b0] sm:$0xff]
    %v2402 = vld [vmem:[#allocation10 + $0x1b8] sm:$0xff]
    %v2403 = vld [vmem:[#allocation10 + $0x1c0] sm:$0xff]
    %v2404 = vld [vmem:[#allocation10 + $0x1c8] sm:$0xff]
    %v2405 = vld [vmem:[#allocation10 + $0x1d0] sm:$0xff]
    %v2406 = vld [vmem:[#allocation10 + $0x1d8] sm:$0xff]
    %v2407 = vld [vmem:[#allocation10 + $0x1e0] sm:$0xff]
    %v2408 = vld [vmem:[#allocation10 + $0x1e8] sm:$0xff]
    %v2409 = vld [vmem:[#allocation10 + $0x1f0] sm:$0xff]
    %v2410 = vld [vmem:[#allocation10 + $0x1f8] sm:$0xff]
    %v2475 = vunpack.c.l.b16 %v2347
    %v2476 = vunpack.c.h.b16 %v2347
    %v2477 = vunpack.c.l.b16 %v2348
    %v2478 = vunpack.c.h.b16 %v2348
    %v2479 = vunpack.c.l.b16 %v2349
    %v2480 = vunpack.c.h.b16 %v2349
    %v2481 = vunpack.c.l.b16 %v2350
    %v2482 = vunpack.c.h.b16 %v2350
    %v2483 = vunpack.c.l.b16 %v2351
    %v2484 = vunpack.c.h.b16 %v2351
    %v2485 = vunpack.c.l.b16 %v2352
    %v2486 = vunpack.c.h.b16 %v2352
    %v2487 = vunpack.c.l.b16 %v2353
    %v2488 = vunpack.c.h.b16 %v2353
    %v2489 = vunpack.c.l.b16 %v2354
    %v2490 = vunpack.c.h.b16 %v2354
    %v2491 = vunpack.c.l.b16 %v2355
    %v2492 = vunpack.c.h.b16 %v2355
    %v2493 = vunpack.c.l.b16 %v2356
    %v2494 = vunpack.c.h.b16 %v2356
    %v2495 = vunpack.c.l.b16 %v2357
    %v2496 = vunpack.c.h.b16 %v2357
    %v2497 = vunpack.c.l.b16 %v2358
    %v2498 = vunpack.c.h.b16 %v2358
    %v2499 = vunpack.c.l.b16 %v2359
    %v2500 = vunpack.c.h.b16 %v2359
    %v2501 = vunpack.c.l.b16 %v2360
    %v2502 = vunpack.c.h.b16 %v2360
    %v2503 = vunpack.c.l.b16 %v2361
    %v2504 = vunpack.c.h.b16 %v2361
    %v2505 = vunpack.c.l.b16 %v2362
    %v2506 = vunpack.c.h.b16 %v2362
    %v2507 = vunpack.c.l.b16 %v2363
    %v2508 = vunpack.c.h.b16 %v2363
    %v2509 = vunpack.c.l.b16 %v2364
    %v2510 = vunpack.c.h.b16 %v2364
    %v2511 = vunpack.c.l.b16 %v2365
    %v2512 = vunpack.c.h.b16 %v2365
    %v2513 = vunpack.c.l.b16 %v2366
    %v2514 = vunpack.c.h.b16 %v2366
    %v2515 = vunpack.c.l.b16 %v2367
    %v2516 = vunpack.c.h.b16 %v2367
    %v2517 = vunpack.c.l.b16 %v2368
    %v2518 = vunpack.c.h.b16 %v2368
    %v2519 = vunpack.c.l.b16 %v2369
    %v2520 = vunpack.c.h.b16 %v2369
    %v2521 = vunpack.c.l.b16 %v2370
    %v2522 = vunpack.c.h.b16 %v2370
    %v2523 = vunpack.c.l.b16 %v2371
    %v2524 = vunpack.c.h.b16 %v2371
    %v2525 = vunpack.c.l.b16 %v2372
    %v2526 = vunpack.c.h.b16 %v2372
    %v2527 = vunpack.c.l.b16 %v2373
    %v2528 = vunpack.c.h.b16 %v2373
    %v2529 = vunpack.c.l.b16 %v2374
    %v2530 = vunpack.c.h.b16 %v2374
    %v2531 = vunpack.c.l.b16 %v2375
    %v2532 = vunpack.c.h.b16 %v2375
    %v2533 = vunpack.c.l.b16 %v2376
    %v2534 = vunpack.c.h.b16 %v2376
    %v2535 = vunpack.c.l.b16 %v2377
    %v2536 = vunpack.c.h.b16 %v2377
    %v2537 = vunpack.c.l.b16 %v2378
    %v2538 = vunpack.c.h.b16 %v2378
    %v2539 = vunpack.c.l.b16 %v2379
    %v2540 = vunpack.c.h.b16 %v2379
    %v2541 = vunpack.c.l.b16 %v2380
    %v2542 = vunpack.c.h.b16 %v2380
    %v2543 = vunpack.c.l.b16 %v2381
    %v2544 = vunpack.c.h.b16 %v2381
    %v2545 = vunpack.c.l.b16 %v2382
    %v2546 = vunpack.c.h.b16 %v2382
    %v2547 = vunpack.c.l.b16 %v2383
    %v2548 = vunpack.c.h.b16 %v2383
    %v2549 = vunpack.c.l.b16 %v2384
    %v2550 = vunpack.c.h.b16 %v2384
    %v2551 = vunpack.c.l.b16 %v2385
    %v2552 = vunpack.c.h.b16 %v2385
    %v2553 = vunpack.c.l.b16 %v2386
    %v2554 = vunpack.c.h.b16 %v2386
    %v2555 = vunpack.c.l.b16 %v2387
    %v2556 = vunpack.c.h.b16 %v2387
    %v2557 = vunpack.c.l.b16 %v2388
    %v2558 = vunpack.c.h.b16 %v2388
    %v2559 = vunpack.c.l.b16 %v2389
    %v2560 = vunpack.c.h.b16 %v2389
    %v2561 = vunpack.c.l.b16 %v2390
    %v2562 = vunpack.c.h.b16 %v2390
    %v2563 = vunpack.c.l.b16 %v2391
    %v2564 = vunpack.c.h.b16 %v2391
    %v2565 = vunpack.c.l.b16 %v2392
    %v2566 = vunpack.c.h.b16 %v2392
    %v2567 = vunpack.c.l.b16 %v2393
    %v2568 = vunpack.c.h.b16 %v2393
    %v2569 = vunpack.c.l.b16 %v2394
    %v2570 = vunpack.c.h.b16 %v2394
    %v2571 = vunpack.c.l.b16 %v2395
    %v2572 = vunpack.c.h.b16 %v2395
    %v2573 = vunpack.c.l.b16 %v2396
    %v2574 = vunpack.c.h.b16 %v2396
    %v2575 = vunpack.c.l.b16 %v2397
    %v2576 = vunpack.c.h.b16 %v2397
    %v2577 = vunpack.c.l.b16 %v2398
    %v2578 = vunpack.c.h.b16 %v2398
    %v2579 = vunpack.c.l.b16 %v2399
    %v2580 = vunpack.c.h.b16 %v2399
    %v2581 = vunpack.c.l.b16 %v2400
    %v2582 = vunpack.c.h.b16 %v2400
    %v2583 = vunpack.c.l.b16 %v2401
    %v2584 = vunpack.c.h.b16 %v2401
    %v2585 = vunpack.c.l.b16 %v2402
    %v2586 = vunpack.c.h.b16 %v2402
    %v2587 = vunpack.c.l.b16 %v2403
    %v2588 = vunpack.c.h.b16 %v2403
    %v2589 = vunpack.c.l.b16 %v2404
    %v2590 = vunpack.c.h.b16 %v2404
    %v2591 = vunpack.c.l.b16 %v2405
    %v2592 = vunpack.c.h.b16 %v2405
    %v2593 = vunpack.c.l.b16 %v2406
    %v2594 = vunpack.c.h.b16 %v2406
    %v2595 = vunpack.c.l.b16 %v2407
    %v2596 = vunpack.c.h.b16 %v2407
    %v2597 = vunpack.c.l.b16 %v2408
    %v2598 = vunpack.c.h.b16 %v2408
    %v2599 = vunpack.c.l.b16 %v2409
    %v2600 = vunpack.c.h.b16 %v2409
    %v2601 = vunpack.c.l.b16 %v2410
    %v2602 = vunpack.c.h.b16 %v2410
    %v2603 = vpack.c.b16 %v2477, %v2475
    %v2604 = vpack.c.b16 %v2478, %v2476
    %v2605 = vpack.c.b16 %v2481, %v2479
    %v2606 = vpack.c.b16 %v2482, %v2480
    %v2607 = vpack.c.b16 %v2485, %v2483
    %v2608 = vpack.c.b16 %v2486, %v2484
    %v2609 = vpack.c.b16 %v2489, %v2487
    %v2610 = vpack.c.b16 %v2490, %v2488
    %v2611 = vpack.c.b16 %v2493, %v2491
    %v2612 = vpack.c.b16 %v2494, %v2492
    %v2613 = vpack.c.b16 %v2497, %v2495
    %v2614 = vpack.c.b16 %v2498, %v2496
    %v2615 = vpack.c.b16 %v2501, %v2499
    %v2616 = vpack.c.b16 %v2502, %v2500
    %v2617 = vpack.c.b16 %v2505, %v2503
    %v2618 = vpack.c.b16 %v2506, %v2504
    %v2619 = vpack.c.b16 %v2509, %v2507
    %v2620 = vpack.c.b16 %v2510, %v2508
    %v2621 = vpack.c.b16 %v2513, %v2511
    %v2622 = vpack.c.b16 %v2514, %v2512
    %v2623 = vpack.c.b16 %v2517, %v2515
    %v2624 = vpack.c.b16 %v2518, %v2516
    %v2625 = vpack.c.b16 %v2521, %v2519
    %v2626 = vpack.c.b16 %v2522, %v2520
    %v2627 = vpack.c.b16 %v2525, %v2523
    %v2628 = vpack.c.b16 %v2526, %v2524
    %v2629 = vpack.c.b16 %v2529, %v2527
    %v2630 = vpack.c.b16 %v2530, %v2528
    %v2631 = vpack.c.b16 %v2533, %v2531
    %v2632 = vpack.c.b16 %v2534, %v2532
    %v2633 = vpack.c.b16 %v2537, %v2535
    %v2634 = vpack.c.b16 %v2538, %v2536
    %v2635 = vpack.c.b16 %v2541, %v2539
    %v2636 = vpack.c.b16 %v2542, %v2540
    %v2637 = vpack.c.b16 %v2545, %v2543
    %v2638 = vpack.c.b16 %v2546, %v2544
    %v2639 = vpack.c.b16 %v2549, %v2547
    %v2640 = vpack.c.b16 %v2550, %v2548
    %v2641 = vpack.c.b16 %v2553, %v2551
    %v2642 = vpack.c.b16 %v2554, %v2552
    %v2643 = vpack.c.b16 %v2557, %v2555
    %v2644 = vpack.c.b16 %v2558, %v2556
    %v2645 = vpack.c.b16 %v2561, %v2559
    %v2646 = vpack.c.b16 %v2562, %v2560
    %v2647 = vpack.c.b16 %v2565, %v2563
    %v2648 = vpack.c.b16 %v2566, %v2564
    %v2649 = vpack.c.b16 %v2569, %v2567
    %v2650 = vpack.c.b16 %v2570, %v2568
    %v2651 = vpack.c.b16 %v2573, %v2571
    %v2652 = vpack.c.b16 %v2574, %v2572
    %v2653 = vpack.c.b16 %v2577, %v2575
    %v2654 = vpack.c.b16 %v2578, %v2576
    %v2655 = vpack.c.b16 %v2581, %v2579
    %v2656 = vpack.c.b16 %v2582, %v2580
    %v2657 = vpack.c.b16 %v2585, %v2583
    %v2658 = vpack.c.b16 %v2586, %v2584
    %v2659 = vpack.c.b16 %v2589, %v2587
    %v2660 = vpack.c.b16 %v2590, %v2588
    %v2661 = vpack.c.b16 %v2593, %v2591
    %v2662 = vpack.c.b16 %v2594, %v2592
    %v2663 = vpack.c.b16 %v2597, %v2595
    %v2664 = vpack.c.b16 %v2598, %v2596
    %v2665 = vpack.c.b16 %v2601, %v2599
    %v2666 = vpack.c.b16 %v2602, %v2600
    %2731 = vmatpush.bf16.msra.mxu0 %v2617
    %2732 = vmatpush.bf16.msra.mxu0 %v2615
    %2733 = vmatpush.bf16.msra.mxu0 %v2613
    %2734 = vmatpush.bf16.msra.mxu0 %v2611
    %2735 = vmatpush.bf16.msra.mxu0 %v2609
    %2736 = vmatpush.bf16.msra.mxu0 %v2607
    %2737 = vmatpush.bf16.msra.mxu0 %v2605
    %2738 = vmatpush.bf16.msra.mxu0 %v2603
    %2739 = vmatmul.bf16.gmra.mxu0 %v2343
    %v2740 = vpop.f32.mrf.mxu0
    %v2741 = vadd.f32 0.0, %v2740
    %v2742 = vpop.f32.mrf.mxu0
    %v2743 = vadd.f32 0.0, %v2742
    %2744 = vdwg.mxu0
    %2745 = vmatpush.bf16.msra.mxu0 %v2633
    %2746 = vmatpush.bf16.msra.mxu0 %v2631
    %2747 = vmatpush.bf16.msra.mxu0 %v2629
    %2748 = vmatpush.bf16.msra.mxu0 %v2627
    %2749 = vmatpush.bf16.msra.mxu0 %v2625
    %2750 = vmatpush.bf16.msra.mxu0 %v2623
    %2751 = vmatpush.bf16.msra.mxu0 %v2621
    %2752 = vmatpush.bf16.msra.mxu0 %v2619
    %2753 = vmatmul.bf16.gmra.mxu0 %v2344
    %v2754 = vpop.f32.mrf.mxu0
    %v2755 = vadd.f32 %v2741, %v2754
    %v2756 = vpop.f32.mrf.mxu0
    %v2757 = vadd.f32 %v2743, %v2756
    %2758 = vdwg.mxu0
    %2759 = vmatpush.bf16.msra.mxu0 %v2649
    %2760 = vmatpush.bf16.msra.mxu0 %v2647
    %2761 = vmatpush.bf16.msra.mxu0 %v2645
    %2762 = vmatpush.bf16.msra.mxu0 %v2643
    %2763 = vmatpush.bf16.msra.mxu0 %v2641
    %2764 = vmatpush.bf16.msra.mxu0 %v2639
    %2765 = vmatpush.bf16.msra.mxu0 %v2637
    %2766 = vmatpush.bf16.msra.mxu0 %v2635
    %2767 = vmatmul.bf16.gmra.mxu0 %v2345
    %v2768 = vpop.f32.mrf.mxu0
    %v2769 = vadd.f32 %v2755, %v2768
    %v2770 = vpop.f32.mrf.mxu0
    %v2771 = vadd.f32 %v2757, %v2770
    %2772 = vdwg.mxu0
    %2773 = vmatpush.bf16.msra.mxu0 %v2665
    %2774 = vmatpush.bf16.msra.mxu0 %v2663
    %2775 = vmatpush.bf16.msra.mxu0 %v2661
    %2776 = vmatpush.bf16.msra.mxu0 %v2659
    %2777 = vmatpush.bf16.msra.mxu0 %v2657
    %2778 = vmatpush.bf16.msra.mxu0 %v2655
    %2779 = vmatpush.bf16.msra.mxu0 %v2653
    %2780 = vmatpush.bf16.msra.mxu0 %v2651
    %2781 = vmatmul.bf16.gmra.mxu0 %v2346
    %v2782 = vpop.f32.mrf.mxu0
    %v2783 = vadd.f32 %v2769, %v2782
    %v2784 = vpop.f32.mrf.mxu0
    %v2785 = vadd.f32 %v2771, %v2784
    %2786 = vdwg.mxu0
    %2787 = vmatpush.bf16.msra.mxu0 %v2618
    %2788 = vmatpush.bf16.msra.mxu0 %v2616
    %2789 = vmatpush.bf16.msra.mxu0 %v2614
    %2790 = vmatpush.bf16.msra.mxu0 %v2612
    %2791 = vmatpush.bf16.msra.mxu0 %v2610
    %2792 = vmatpush.bf16.msra.mxu0 %v2608
    %2793 = vmatpush.bf16.msra.mxu0 %v2606
    %2794 = vmatpush.bf16.msra.mxu0 %v2604
    %2795 = vmatmul.bf16.gmra.mxu0 %v2343
    %v2796 = vpop.f32.mrf.mxu0
    %v2797 = vadd.f32 0.0, %v2796
    %v2798 = vpop.f32.mrf.mxu0
    %v2799 = vadd.f32 0.0, %v2798
    %2800 = vdwg.mxu0
    %2801 = vmatpush.bf16.msra.mxu0 %v2634
    %2802 = vmatpush.bf16.msra.mxu0 %v2632
    %2803 = vmatpush.bf16.msra.mxu0 %v2630
    %2804 = vmatpush.bf16.msra.mxu0 %v2628
    %2805 = vmatpush.bf16.msra.mxu0 %v2626
    %2806 = vmatpush.bf16.msra.mxu0 %v2624
    %2807 = vmatpush.bf16.msra.mxu0 %v2622
    %2808 = vmatpush.bf16.msra.mxu0 %v2620
    %2809 = vmatmul.bf16.gmra.mxu0 %v2344
    %v2810 = vpop.f32.mrf.mxu0
    %v2811 = vadd.f32 %v2797, %v2810
    %v2812 = vpop.f32.mrf.mxu0
    %v2813 = vadd.f32 %v2799, %v2812
    %2814 = vdwg.mxu0
    %2815 = vmatpush.bf16.msra.mxu0 %v2650
    %2816 = vmatpush.bf16.msra.mxu0 %v2648
    %2817 = vmatpush.bf16.msra.mxu0 %v2646
    %2818 = vmatpush.bf16.msra.mxu0 %v2644
    %2819 = vmatpush.bf16.msra.mxu0 %v2642
    %2820 = vmatpush.bf16.msra.mxu0 %v2640
    %2821 = vmatpush.bf16.msra.mxu0 %v2638
    %2822 = vmatpush.bf16.msra.mxu0 %v2636
    %2823 = vmatmul.bf16.gmra.mxu0 %v2345
    %v2824 = vpop.f32.mrf.mxu0
    %v2825 = vadd.f32 %v2811, %v2824
    %v2826 = vpop.f32.mrf.mxu0
    %v2827 = vadd.f32 %v2813, %v2826
    %2828 = vdwg.mxu0
    %2829 = vmatpush.bf16.msra.mxu0 %v2666
    %2830 = vmatpush.bf16.msra.mxu0 %v2664
    %2831 = vmatpush.bf16.msra.mxu0 %v2662
    %2832 = vmatpush.bf16.msra.mxu0 %v2660
    %2833 = vmatpush.bf16.msra.mxu0 %v2658
    %2834 = vmatpush.bf16.msra.mxu0 %v2656
    %2835 = vmatpush.bf16.msra.mxu0 %v2654
    %2836 = vmatpush.bf16.msra.mxu0 %v2652
    %2837 = vmatmul.bf16.gmra.mxu0 %v2346
    %v2838 = vpop.f32.mrf.mxu0
    %v2839 = vadd.f32 %v2825, %v2838
    %v2840 = vpop.f32.mrf.mxu0
    %v2841 = vadd.f32 %v2827, %v2840
    %2842 = vdwg.mxu0
    %2843 = vxpose.xlu0.b32.start [1/16] %v2839, 128
    %2844 = vxpose.xlu0.b32.cont [2/16] %v2841, 128
    %2845 = vxpose.xlu0.b32.cont [3/16] 0.0, 128
    %2846 = vxpose.xlu0.b32.cont [4/16] 0.0, 128
    %2847 = vxpose.xlu0.b32.cont [5/16] 0.0, 128
    %2848 = vxpose.xlu0.b32.cont [6/16] 0.0, 128
    %2849 = vxpose.xlu0.b32.cont [7/16] 0.0, 128
    %2850 = vxpose.xlu0.b32.cont [8/16] 0.0, 128
    %2851 = vxpose.xlu0.b32.cont [9/16] 0.0, 128
    %2852 = vxpose.xlu0.b32.cont [10/16] 0.0, 128
    %2853 = vxpose.xlu0.b32.cont [11/16] 0.0, 128
    %2854 = vxpose.xlu0.b32.cont [12/16] 0.0, 128
    %2855 = vxpose.xlu0.b32.cont [13/16] 0.0, 128
    %2856 = vxpose.xlu0.b32.cont [14/16] 0.0, 128
    %2857 = vxpose.xlu0.b32.cont [15/16] 0.0, 128
    %2858 = vxpose.xlu0.b32.end [16/16] 0.0, 128
    %v2859 = vpop.trf.xlu0
    %v2860 = vpop.trf.xlu0
    %v2861 = vpop.trf.xlu0
    %v2862 = vpop.trf.xlu0
    %v2863 = vpop.trf.xlu0
    %v2864 = vpop.trf.xlu0
    %v2865 = vpop.trf.xlu0
    %v2866 = vpop.trf.xlu0
    %v2867 = vpop.trf.xlu0
    %v2868 = vpop.trf.xlu0
    %v2869 = vpop.trf.xlu0
    %v2870 = vpop.trf.xlu0
    %v2871 = vpop.trf.xlu0
    %v2872 = vpop.trf.xlu0
    %v2873 = vpop.trf.xlu0
    %v2874 = vpop.trf.xlu0
    %2876 = vset.pattern.permute.xlu0 1
    %2877 = vperm.xlu0 %2876, %v2839
    %v2878 = vpop.permute.xlu0 %2877
    %2881 = vset.pattern.permute.xlu0 1
    %2882 = vperm.xlu0 %2881, %v2841
    %v2883 = vpop.permute.xlu0 %2882
    %v2885 = vperm.slane %v2859, 0
    %v2886 = vadd.f32 %v2878, %v2885
    %v2887 = vadd.f32 %v2883, %v2885
    %v2888 = vmul.f32 %v2886, 0.2
    %v2889 = vmul.f32 %v2887, 0.2
    %v2890 = vmax.f32 %v2886, %v2888
    %v2891 = vmax.f32 %v2887, %v2889
    %v2892 = vadd.f32 %v2890, %v122
    %v2893 = vadd.f32 %v2891, %v123
    %v2894 = vsel %vm564, %v2892, -inf
    %2895 = vmax.xlane.f32.xlu0 %v2894
    %v2896 = vpop.xlane.xlu0 %2895
    %v2897 = vsel %vm564, %v2893, -inf
    %2898 = vmax.xlane.f32.xlu0 %v2897
    %v2899 = vpop.xlane.xlu0 %2898
    %v2900 = vsub.f32 %v2892, %v2896
    %v2901 = vsub.f32 %v2893, %v2899
    %v2902 = vmul.f32 %v2900, 1.442695
    %v2903 = vpow.pop %v2902
    %v2904 = vmul.f32 %v2901, 1.442695
    %v2905 = vpow.pop %v2904
    %v2906 = vsel %vm564, %v2903, 0.0
    %2907 = vadd.xlane.f32.xlu0 %v2906
    %v2908 = vpop.xlane.xlu0 %2907
    %v2909 = vsel %vm564, %v2905, 0.0
    %2910 = vadd.xlane.f32.xlu0 %v2909
    %v2911 = vpop.xlane.xlu0 %2910
    %v2912 = vrcp.pop %v2908
    %v2913 = vrcp.pop %v2911
    %v2914 = vmul.f32 %v2903, %v2912
    %v2915 = vmul.f32 %v2905, %v2913
    %v2916 = vpack.c.bf16 %v2915, %v2914
    %v2917 = vpack.c.bf16 %v2785, %v2783
    %v2918 = vld [vmem:[%s7] sm:$0x1]
    %v2920 = vperm.slane %v2918, 0
    %v2923 = vsel %vm564, %v2916, 0
    %2925 = vmatpush.bf16.msra.mxu0 0
    %2926 = vmatpush.bf16.msra.mxu0 0
    %2927 = vmatpush.bf16.msra.mxu0 0
    %2928 = vmatpush.bf16.msra.mxu0 0
    %2929 = vmatpush.bf16.msra.mxu0 0
    %2930 = vmatpush.bf16.msra.mxu0 0
    %2931 = vmatpush.bf16.msra.mxu0 0
    %2932 = vmatpush.bf16.msra.mxu0 %v2917
    %2933 = vmatmul.bf16.gmra.mxu0 %v2923
    %v2934 = vpop.f32.mrf.mxu0
    %v2935 = vadd.f32 %v2920, %v2934
    %v2936 = vpop.f32.mrf.mxu0
    %v2937 = vadd.f32 %v2920, %v2936
    %2938 = vdwg.mxu0
    %2939 = vst [vmem:[%s8] sm:$0xff] %v2935
    %2940 = vst [vmem:[%s8 + $0x8] sm:$0xff] %v2937
    // Predicated region
    $region58: #{inductive_gat_forward.1} parent=1 // pred_check
      _
    $region59: #{inductive_gat_forward.1} parent=1 // pred_check_branch
      %2942 = sbr.rel (0) target = $region61
    $region60: #{inductive_gat_forward.1} parent=1 // pred_region
      _
    $region61: #{inductive_gat_forward.1} parent=1 // pred_fallthru
      _
    // Predicated region
    $region62: #{inductive_gat_forward.1} parent=1 // pred_check
      _
    $region63: #{inductive_gat_forward.1} parent=1 // pred_check_branch
      %2944 = sbr.rel (0) target = $region65
    $region64: #{inductive_gat_forward.1} parent=1 // pred_region
      _
    $region65: #{inductive_gat_forward.1} parent=1 // pred_fallthru
      _
    %2945 = vsyncpa [#allocation3], 1
    %2946 = vsyncpa [#allocation5], 1
    %2947 = vsyncpa [#allocation8], 1
    %2948 = vsyncpa [#allocation11], 1

</llo_original>
